<compile_context>
chip_gen: v7x
topology: tpu7x:2x2x1
jax: 0.10.0
libtpu: 0.0.40
codegen_flags: <defaults>
</compile_context>

<pallas_src>
import jax
import jax.numpy as jnp
import numpy as np
from jax.experimental import pallas as pl
from jax.experimental.pallas import tpu as pltpu

# Fixed normalization constants from the source script (baked into the kernel).
X_MEAN = (-0.36242136, 0.10387579)
X_INV_STD = (1.0 / 335.14358049, 1.0 / 335.16320865)

TILE = 2048  # batch rows per grid step (multiple of 128; ~0.8 MiB activations)


def mlp_kernel(xt_ref, w1t_ref, b1_ref, w2t_ref, b2_ref, w3_ref, b3_ref, o_ref):
    # xt_ref: (2, TILE) raw features (batch on lanes). Fused normalization (VPU).
    x0 = (xt_ref[0:1, :] - X_MEAN[0]) * X_INV_STD[0]      # (1, TILE)
    x1 = (xt_ref[1:2, :] - X_MEAN[1]) * X_INV_STD[1]      # (1, TILE)

    # Layer 1 (2 -> 32): K=2 is pathological for the MXU, do it on the VPU
    # with broadcasts:  h1[f, n] = w1t[f,0]*x0[n] + w1t[f,1]*x1[n] + b1[f]
    h1 = w1t_ref[:, 0:1] * x0 + w1t_ref[:, 1:2] * x1 + b1_ref[...]   # (32, TILE)
    h1 = jnp.maximum(h1, 0.0)

    # Layer 2 (32 -> 64): the only real matmul, on the MXU.
    h2 = jnp.dot(w2t_ref[...], h1, preferred_element_type=jnp.float32)
    h2 = jnp.maximum(h2 + b2_ref[...], 0.0)               # (64, TILE)

    # Layer 3 (64 -> 1): VPU multiply + sublane reduction (XLU) instead of a
    # 1-wide MXU matmul; b3 comes from SMEM as a scalar.
    out = jnp.sum(w3_ref[...] * h2, axis=0, keepdims=True)  # (1, TILE)
    o_ref[...] = out + b3_ref[0]


def moganet_forward(x, params, tile=TILE):
    """x: (N, 2) float32 raw (un-normalized) samples. Returns (N, 1) float32."""
    w1, b1, w2, b2, w3, b3 = params  # w stored as (in, out), b as (out,)
    n = x.shape[0]
    num_tiles = int(pl.cdiv(max(n, 1), tile))
    n_pad = num_tiles * tile

    # Lane-dense transposed layout: (N, 2) -> (2, N_pad), batch on lanes.
    xt = jnp.pad(jnp.transpose(x.astype(jnp.float32)), ((0, 0), (0, n_pad - n)))

    # Transposed weights for the feature-major layout (tiny, one-time plumbing).
    w1t = jnp.transpose(w1)          # (32, 2)
    b1c = b1.reshape(32, 1)
    w2t = jnp.transpose(w2)          # (64, 32)
    b2c = b2.reshape(64, 1)
    w3c = w3.reshape(64, 1)
    b3s = b3.reshape(1)              # scalar bias -> SMEM

    weight_bytes = 4 * (32 * 2 + 32 + 64 * 32 + 64 + 64 + 1)
    cost = pl.CostEstimate(
        flops=4352 * n_pad,                       # ~2*32 + 2*32*64 + 2*64 per row
        transcendentals=0,
        bytes_accessed=12 * n_pad + weight_bytes,  # 8 B in + 4 B out per row
    )

    out = pl.pallas_call(
        mlp_kernel,
        out_shape=jax.ShapeDtypeStruct((1, n_pad), jnp.float32),
        grid=(num_tiles,),
        in_specs=[
            pl.BlockSpec((2, tile), lambda i: (0, i)),       # x tile (lane-dense)
            pl.BlockSpec((32, 2), lambda i: (0, 0)),         # W1^T (resident)
            pl.BlockSpec((32, 1), lambda i: (0, 0)),         # b1
            pl.BlockSpec((64, 32), lambda i: (0, 0)),        # W2^T
            pl.BlockSpec((64, 1), lambda i: (0, 0)),         # b2
            pl.BlockSpec((64, 1), lambda i: (0, 0)),         # W3
            pl.BlockSpec(memory_space=pltpu.MemorySpace.SMEM),  # b3 scalar
        ],
        out_specs=pl.BlockSpec((1, tile), lambda i: (0, i)),  # lane-dense output
        compiler_params=pltpu.CompilerParams(
            dimension_semantics=("parallel",),   # megacore sharding on v7x
            vmem_limit_bytes=32 * 1024 * 1024,
        ),
        cost_estimate=cost,
    )(xt, w1t, b1c, w2t, b2c, w3c, b3s)

    return out[0, :n].reshape(n, 1)


def init_params(key):
    """Deterministic synthetic params matching nn.Linear default init
    (uniform(-1/sqrt(fan_in), 1/sqrt(fan_in))). Weights stored as (in, out)."""
    def linear(key, fan_in, fan_out):
        kw, kb = jax.random.split(key)
        bound = 1.0 / np.sqrt(fan_in)
        w = jax.random.uniform(kw, (fan_in, fan_out), jnp.float32, -bound, bound)
        b = jax.random.uniform(kb, (fan_out,), jnp.float32, -bound, bound)
        return w, b

    k1, k2, k3 = jax.random.split(key, 3)
    w1, b1 = linear(k1, 2, 32)
    w2, b2 = linear(k2, 32, 64)
    w3, b3 = linear(k3, 64, 1)
    return (w1, b1, w2, b2, w3, b3)


def reference_forward(x, params):
    w1, b1, w2, b2, w3, b3 = params
    mean = jnp.asarray(X_MEAN, jnp.float32)
    inv_std = jnp.asarray(X_INV_STD, jnp.float32)
    xn = ((x.astype(jnp.float32) - mean) * inv_std)
    h1 = jnp.maximum(xn @ w1 + b1, 0.0)
    h2 = jnp.maximum(h1 @ w2 + b2, 0.0)
    return h2 @ w3 + b3


if __name__ == "__main__":
    key = jax.random.PRNGKey(0)
    kx, kp, kx2 = jax.random.split(key, 3)
    params = init_params(kp)

    # Small batch of raw (un-normalized) 2-feature samples.
    x = jax.random.normal(kx, (8, 2), jnp.float32) * 300.0
    out = jax.block_until_ready(moganet_forward(x, params))
    ref = reference_forward(x, params)
    assert out.shape == (8, 1)
    np.testing.assert_allclose(np.asarray(out), np.asarray(ref),
                               rtol=1e-4, atol=1e-5)

    # Secondary check: exercises a multi-tile grid + ragged tail padding.
    x2 = jax.random.normal(kx2, (4100, 2), jnp.float32) * 300.0
    out2 = jax.block_until_ready(moganet_forward(x2, params))
    ref2 = reference_forward(x2, params)
    assert out2.shape == (4100, 1)
    np.testing.assert_allclose(np.asarray(out2), np.asarray(ref2),
                               rtol=1e-4, atol=1e-5)

    print("KERNEL_OK")
</pallas_src>

<mosaic_0001>
module attributes {stable_mosaic.version = 11 : i64} {
  func.func @mlp_kernel(%arg0: i32, %arg1: memref<2x2048xf32, #tpu.memory_space<vmem>>, %arg2: memref<32x2xf32, #tpu.memory_space<vmem>>, %arg3: memref<32x1xf32, #tpu.memory_space<vmem>>, %arg4: memref<64x32xf32, #tpu.memory_space<vmem>>, %arg5: memref<64x1xf32, #tpu.memory_space<vmem>>, %arg6: memref<64x1xf32, #tpu.memory_space<vmem>>, %arg7: memref<1xf32, #tpu.memory_space<smem>>, %arg8: memref<1x2048xf32, #tpu.memory_space<vmem>>) attributes {dimension_semantics = [#tpu.dimension_semantics<parallel>], iteration_bounds = array<i64: 1>, scalar_prefetch = 0 : i64, scratch_operands = 0 : i64, tpu.core_type = #tpu.core_type<tc>, window_params = [{transform_indices = @transform_0, window_bounds = array<i64: 2, 2048>}, {pipeline_mode = #tpu.pipeline_mode<synchronous>, transform_indices = @transform_1, window_bounds = array<i64: 32, 2>}, {pipeline_mode = #tpu.pipeline_mode<synchronous>, transform_indices = @transform_2, window_bounds = array<i64: 32, 1>}, {pipeline_mode = #tpu.pipeline_mode<synchronous>, transform_indices = @transform_3, window_bounds = array<i64: 64, 32>}, {pipeline_mode = #tpu.pipeline_mode<synchronous>, transform_indices = @transform_4, window_bounds = array<i64: 64, 1>}, {pipeline_mode = #tpu.pipeline_mode<synchronous>, transform_indices = @transform_5, window_bounds = array<i64: 64, 1>}, {transform_indices = @transform_6, window_bounds = array<i64: 1>}, {transform_indices = @transform_7, window_bounds = array<i64: 1, 2048>}]} {
    %c0 = arith.constant 0 : index
    %c0_0 = arith.constant 0 : index
    %0 = vector.load %arg1[%c0, %c0_0] : memref<2x2048xf32, #tpu.memory_space<vmem>>, vector<1x2048xf32>
    %cst = arith.constant -0.362421364 : f32
    %1 = vector.broadcast %cst : f32 to vector<1x2048xf32>
    %2 = arith.subf %0, %1 : vector<1x2048xf32>
    %cst_1 = arith.constant 0.00298379571 : f32
    %3 = vector.broadcast %cst_1 : f32 to vector<1x2048xf32>
    %4 = arith.mulf %2, %3 : vector<1x2048xf32>
    %c1 = arith.constant 1 : index
    %c0_2 = arith.constant 0 : index
    %5 = vector.load %arg1[%c1, %c0_2] : memref<2x2048xf32, #tpu.memory_space<vmem>>, vector<1x2048xf32>
    %cst_3 = arith.constant 0.103875794 : f32
    %6 = vector.broadcast %cst_3 : f32 to vector<1x2048xf32>
    %7 = arith.subf %5, %6 : vector<1x2048xf32>
    %cst_4 = arith.constant 0.00298362109 : f32
    %8 = vector.broadcast %cst_4 : f32 to vector<1x2048xf32>
    %9 = arith.mulf %7, %8 : vector<1x2048xf32>
    %c0_5 = arith.constant 0 : index
    %c0_6 = arith.constant 0 : index
    %10 = vector.load %arg2[%c0_5, %c0_6] : memref<32x2xf32, #tpu.memory_space<vmem>>, vector<32x1xf32>
    %11 = vector.broadcast %10 : vector<32x1xf32> to vector<32x2048xf32>
    %12 = vector.broadcast %4 : vector<1x2048xf32> to vector<32x2048xf32>
    %13 = arith.mulf %11, %12 : vector<32x2048xf32>
    %c0_7 = arith.constant 0 : index
    %c1_8 = arith.constant 1 : index
    %14 = vector.load %arg2[%c0_7, %c1_8] : memref<32x2xf32, #tpu.memory_space<vmem>>, vector<32x1xf32>
    %15 = vector.broadcast %14 : vector<32x1xf32> to vector<32x2048xf32>
    %16 = vector.broadcast %9 : vector<1x2048xf32> to vector<32x2048xf32>
    %17 = arith.mulf %15, %16 : vector<32x2048xf32>
    %18 = arith.addf %13, %17 : vector<32x2048xf32>
    %c0_9 = arith.constant 0 : index
    %c0_10 = arith.constant 0 : index
    %19 = vector.load %arg3[%c0_9, %c0_10] : memref<32x1xf32, #tpu.memory_space<vmem>>, vector<32x1xf32>
    %20 = vector.broadcast %19 : vector<32x1xf32> to vector<32x2048xf32>
    %21 = arith.addf %18, %20 : vector<32x2048xf32>
    %cst_11 = arith.constant 0.000000e+00 : f32
    %22 = vector.broadcast %cst_11 : f32 to vector<32x2048xf32>
    %23 = arith.maximumf %21, %22 : vector<32x2048xf32>
    %c0_12 = arith.constant 0 : index
    %c0_13 = arith.constant 0 : index
    %24 = vector.load %arg4[%c0_12, %c0_13] : memref<64x32xf32, #tpu.memory_space<vmem>>, vector<64x32xf32>
    %cst_14 = arith.constant dense<0.000000e+00> : vector<64x2048xf32>
    %25 = tpu.matmul %24, %23, %cst_14 {dimension_numbers = #tpu.dot_dimension_numbers<[1], [0], [0], [1], [0, 0, 1, 1], [], []>} : vector<64x32xf32>, vector<32x2048xf32>, vector<64x2048xf32> -> vector<64x2048xf32>
    %c0_15 = arith.constant 0 : index
    %c0_16 = arith.constant 0 : index
    %26 = vector.load %arg5[%c0_15, %c0_16] : memref<64x1xf32, #tpu.memory_space<vmem>>, vector<64x1xf32>
    %27 = vector.broadcast %26 : vector<64x1xf32> to vector<64x2048xf32>
    %28 = arith.addf %25, %27 : vector<64x2048xf32>
    %cst_17 = arith.constant 0.000000e+00 : f32
    %29 = vector.broadcast %cst_17 : f32 to vector<64x2048xf32>
    %30 = arith.maximumf %28, %29 : vector<64x2048xf32>
    %c0_18 = arith.constant 0 : index
    %c0_19 = arith.constant 0 : index
    %31 = vector.load %arg6[%c0_18, %c0_19] : memref<64x1xf32, #tpu.memory_space<vmem>>, vector<64x1xf32>
    %32 = vector.broadcast %31 : vector<64x1xf32> to vector<64x2048xf32>
    %33 = arith.mulf %32, %30 : vector<64x2048xf32>
    %cst_20 = arith.constant dense<0.000000e+00> : vector<2048xf32>
    %34 = vector.multi_reduction <add>, %33, %cst_20 [0] : vector<64x2048xf32> to vector<2048xf32>
    %35 = vector.shape_cast %34 : vector<2048xf32> to vector<1x2048xf32>
    %c0_21 = arith.constant 0 : index
    %36 = memref.load %arg7[%c0_21] : memref<1xf32, #tpu.memory_space<smem>>
    %37 = vector.broadcast %36 : f32 to vector<1x2048xf32>
    %38 = arith.addf %35, %37 : vector<1x2048xf32>
    %c0_22 = arith.constant 0 : index
    %c0_23 = arith.constant 0 : index
    %39 = vector.load %arg8[%c0_22, %c0_23] : memref<1x2048xf32, #tpu.memory_space<vmem>>, vector<1x2048xf32>
    tpu.vector_store %arg8[%c0_22, %c0_23], %38 {strides = array<i32>} : memref<1x2048xf32, #tpu.memory_space<vmem>>, vector<1x2048xf32>,
    return
  }
  func.func @transform_0(%arg0: i32) -> (i32, i32) {
    %c0_i32 = arith.constant 0 : i32
    %c0_i32_0 = arith.constant 0 : i32
    return %c0_i32, %arg0 : i32, i32
  }
  func.func @transform_1(%arg0: i32) -> (i32, i32) {
    %c0_i32 = arith.constant 0 : i32
    %c0_i32_0 = arith.constant 0 : i32
    %c0_i32_1 = arith.constant 0 : i32
    return %c0_i32, %c0_i32_0 : i32, i32
  }
  func.func @transform_2(%arg0: i32) -> (i32, i32) {
    %c0_i32 = arith.constant 0 : i32
    %c0_i32_0 = arith.constant 0 : i32
    %c0_i32_1 = arith.constant 0 : i32
    return %c0_i32, %c0_i32_0 : i32, i32
  }
  func.func @transform_3(%arg0: i32) -> (i32, i32) {
    %c0_i32 = arith.constant 0 : i32
    %c0_i32_0 = arith.constant 0 : i32
    %c0_i32_1 = arith.constant 0 : i32
    return %c0_i32, %c0_i32_0 : i32, i32
  }
  func.func @transform_4(%arg0: i32) -> (i32, i32) {
    %c0_i32 = arith.constant 0 : i32
    %c0_i32_0 = arith.constant 0 : i32
    %c0_i32_1 = arith.constant 0 : i32
    return %c0_i32, %c0_i32_0 : i32, i32
  }
  func.func @transform_5(%arg0: i32) -> (i32, i32) {
    %c0_i32 = arith.constant 0 : i32
    %c0_i32_0 = arith.constant 0 : i32
    %c0_i32_1 = arith.constant 0 : i32
    return %c0_i32, %c0_i32_0 : i32, i32
  }
  func.func @transform_6(%arg0: i32) -> i32 {
    %c0_i32 = arith.constant 0 : i32
    %c0_i32_0 = arith.constant 0 : i32
    return %c0_i32 : i32
  }
  func.func @transform_7(%arg0: i32) -> (i32, i32) {
    %c0_i32 = arith.constant 0 : i32
    %c0_i32_0 = arith.constant 0 : i32
    return %c0_i32, %arg0 : i32, i32
  }
}

</mosaic_0001>

<llo_original>
// kernel: tpu_custom_call.1
$region0: #{tpu_custom_call.1}
  #allocation0 [shape = 'u32[]', space=smem, size = 0x4, offset = 0x4, fixed_abs, tag = 'smem constant byte address 0x4 - core index']
  #allocation1 [shape = 'u32[144,128]{1,0:T(1,128)}', space=vmem, size = 0x12000, scoped, tag = 'internal scratch']
  #allocation2 [shape = 'f32[1]{0:T(128)S(6)}', space=smem, size = 0x200, scoped, tag = 'scoped memory for tpu_custom_call.1']
  %s0 = inlined_call_operand.vmem [shape: f32[2,2048], index: 0, kind: input, shape index: {}]
  %s1 = inlined_call_operand.vmem [shape: f32[32,2], index: 1, kind: input, shape index: {}]
  %s2 = inlined_call_operand.vmem [shape: f32[32,1], index: 2, kind: input, shape index: {}]
  %s3 = inlined_call_operand.vmem [shape: f32[64,32], index: 3, kind: input, shape index: {}]
  %s4 = inlined_call_operand.vmem [shape: f32[64,1], index: 4, kind: input, shape index: {}]
  %s5 = inlined_call_operand.vmem [shape: f32[64,1], index: 5, kind: input, shape index: {}]
  %s6 = inlined_call_operand.<no memory space> [shape: f32[1], index: 6, kind: input, shape index: {}]
  %s7 = inlined_call_operand.hbm [shape: f32[1,2048], index: 7, kind: output, shape index: {}]
  %s8 = sld [smem:[#allocation0]]
  $region38: #{tpu_custom_call.1} parent=0
    _
  %s10 = ssub.s32 1, %s8
  %s11 = scalar_select 0, %s10, %s8
  %12 = sst [smem:[#allocation2]] %s6
  $region1: #{tpu_custom_call.1} parent=0
    #allocation3 [shape = 'u8[8192]{0}', space=vmem, size = 0x2000, scoped, tag = 'output window, operand 0, single buffered']
    #allocation4 [shape = 's32[1]{0}', space=sflag, size = 0x4, scoped, tag = 'scoped memory for tpu_custom_call.1']
    %13 = vsyncpa [#allocation4], 0
    // Predicated region
    $region2: #{tpu_custom_call.1} parent=1 // pred_check
      _
    $region3: #{tpu_custom_call.1} parent=1 // pred_check_branch
      %15 = sbr.rel (0) target = $region5
    $region4: #{tpu_custom_call.1} parent=1 // pred_region
      _
    $region5: #{tpu_custom_call.1} parent=1 // pred_fallthru
      _
    // Predicated region
    $region6: #{tpu_custom_call.1} parent=1 // pred_check
      _
    $region7: #{tpu_custom_call.1} parent=1 // pred_check_branch
      %17 = sbr.rel (0) target = $region9
    $region8: #{tpu_custom_call.1} parent=1 // pred_region
      _
    $region9: #{tpu_custom_call.1} parent=1 // pred_fallthru
      _
    // Predicated region
    $region10: #{tpu_custom_call.1} parent=1 // pred_check
      _
    $region11: #{tpu_custom_call.1} parent=1 // pred_check_branch
      %19 = sbr.rel (0) target = $region13
    $region12: #{tpu_custom_call.1} parent=1 // pred_region
      _
    $region13: #{tpu_custom_call.1} parent=1 // pred_fallthru
      _
    // Predicated region
    $region14: #{tpu_custom_call.1} parent=1 // pred_check
      _
    $region15: #{tpu_custom_call.1} parent=1 // pred_check_branch
      %21 = sbr.rel (0) target = $region17
    $region16: #{tpu_custom_call.1} parent=1 // pred_region
      _
    $region17: #{tpu_custom_call.1} parent=1 // pred_fallthru
      _
    // Predicated region
    $region18: #{tpu_custom_call.1} parent=1 // pred_check
      _
    $region19: #{tpu_custom_call.1} parent=1 // pred_check_branch
      %23 = sbr.rel (0) target = $region21
    $region20: #{tpu_custom_call.1} parent=1 // pred_region
      _
    $region21: #{tpu_custom_call.1} parent=1 // pred_fallthru
      _
    // Predicated region
    $region22: #{tpu_custom_call.1} parent=1 // pred_check
      _
    $region23: #{tpu_custom_call.1} parent=1 // pred_check_branch
      %25 = sbr.rel (0) target = $region25
    $region24: #{tpu_custom_call.1} parent=1 // pred_region
      _
    $region25: #{tpu_custom_call.1} parent=1 // pred_fallthru
      _
    // Predicated region
    $region26: #{tpu_custom_call.1} parent=1 // pred_check
      _
    $region27: #{tpu_custom_call.1} parent=1 // pred_check_branch
      %27 = sbr.rel (0) target = $region29
    $region28: #{tpu_custom_call.1} parent=1 // pred_region
      _
    $region29: #{tpu_custom_call.1} parent=1 // pred_fallthru
      _
    %v28 = vld [vmem:[%s0] ss:$2 sm:$0xff]
    %s29 = scalar_lea.vmem %s0, 16
    %v30 = vld [vmem:[%s29] ss:$2 sm:$0xff]
    %v31 = vsub.f32 %v28, -0.36242136
    %v32 = vsub.f32 %v30, -0.36242136
    %v33 = vmul.f32 %v31, 0.0029837957
    %v34 = vmul.f32 %v32, 0.0029837957
    %s35 = scalar_lea.vmem %s0, 1
    %v36 = vld [vmem:[%s35] ss:$2 sm:$0xff]
    %s37 = scalar_lea.vmem %s0, 17
    %v38 = vld [vmem:[%s37] ss:$2 sm:$0xff]
    %v39 = vsub.f32 %v36, 0.10387579
    %v40 = vsub.f32 %v38, 0.10387579
    %v41 = vmul.f32 %v39, 0.002983621
    %v42 = vmul.f32 %v40, 0.002983621
    %v43 = vld [vmem:[%s1] sm:$0xff]
    %v44 = vld [vmem:[%s1 + $0x8] sm:$0xff]
    %v45 = vld [vmem:[%s1 + $0x10] sm:$0xff]
    %v46 = vld [vmem:[%s1 + $0x18] sm:$0xff]
    %48 = vset.pattern.permute.xlu0 0
    %49 = vperm.xlu0 %48, %v43
    %v50 = vpop.permute.xlu0 %49
    %53 = vset.pattern.permute.xlu0 0
    %54 = vperm.xlu0 %53, %v44
    %v55 = vpop.permute.xlu0 %54
    %58 = vset.pattern.permute.xlu0 0
    %59 = vperm.xlu0 %58, %v45
    %v60 = vpop.permute.xlu0 %59
    %63 = vset.pattern.permute.xlu0 0
    %64 = vperm.xlu0 %63, %v46
    %v65 = vpop.permute.xlu0 %64
    %v69 = vlaneseq
    %v70 = vshrl.u32 %v69, 7
    %v71 = vsub.s32 0, %v70
    %v72 = vrot.slane %v33, %v71
    %v73 = vlaneseq
    %v74 = vshrl.u32 %v73, 7
    %v75 = vsub.s32 1, %v74
    %v76 = vrot.slane %v33, %v75
    %v77 = vlaneseq
    %v78 = vshrl.u32 %v77, 7
    %v79 = vsub.s32 2, %v78
    %v80 = vrot.slane %v33, %v79
    %v81 = vlaneseq
    %v82 = vshrl.u32 %v81, 7
    %v83 = vsub.s32 3, %v82
    %v84 = vrot.slane %v33, %v83
    %v85 = vlaneseq
    %v86 = vshrl.u32 %v85, 7
    %v87 = vsub.s32 4, %v86
    %v88 = vrot.slane %v33, %v87
    %v89 = vlaneseq
    %v90 = vshrl.u32 %v89, 7
    %v91 = vsub.s32 5, %v90
    %v92 = vrot.slane %v33, %v91
    %v93 = vlaneseq
    %v94 = vshrl.u32 %v93, 7
    %v95 = vsub.s32 6, %v94
    %v96 = vrot.slane %v33, %v95
    %v97 = vlaneseq
    %v98 = vshrl.u32 %v97, 7
    %v99 = vsub.s32 7, %v98
    %v100 = vrot.slane %v33, %v99
    %v101 = vlaneseq
    %v102 = vshrl.u32 %v101, 7
    %v103 = vsub.s32 0, %v102
    %v104 = vrot.slane %v34, %v103
    %v105 = vlaneseq
    %v106 = vshrl.u32 %v105, 7
    %v107 = vsub.s32 1, %v106
    %v108 = vrot.slane %v34, %v107
    %v109 = vlaneseq
    %v110 = vshrl.u32 %v109, 7
    %v111 = vsub.s32 2, %v110
    %v112 = vrot.slane %v34, %v111
    %v113 = vlaneseq
    %v114 = vshrl.u32 %v113, 7
    %v115 = vsub.s32 3, %v114
    %v116 = vrot.slane %v34, %v115
    %v117 = vlaneseq
    %v118 = vshrl.u32 %v117, 7
    %v119 = vsub.s32 4, %v118
    %v120 = vrot.slane %v34, %v119
    %v121 = vlaneseq
    %v122 = vshrl.u32 %v121, 7
    %v123 = vsub.s32 5, %v122
    %v124 = vrot.slane %v34, %v123
    %v125 = vlaneseq
    %v126 = vshrl.u32 %v125, 7
    %v127 = vsub.s32 6, %v126
    %v128 = vrot.slane %v34, %v127
    %v129 = vlaneseq
    %v130 = vshrl.u32 %v129, 7
    %v131 = vsub.s32 7, %v130
    %v132 = vrot.slane %v34, %v131
    %v149 = vmul.f32 %v50, %v72
    %v150 = vmul.f32 %v50, %v76
    %v151 = vmul.f32 %v50, %v80
    %v152 = vmul.f32 %v50, %v84
    %v153 = vmul.f32 %v50, %v88
    %v154 = vmul.f32 %v50, %v92
    %v155 = vmul.f32 %v50, %v96
    %v156 = vmul.f32 %v50, %v100
    %v157 = vmul.f32 %v50, %v104
    %v158 = vmul.f32 %v50, %v108
    %v159 = vmul.f32 %v50, %v112
    %v160 = vmul.f32 %v50, %v116
    %v161 = vmul.f32 %v50, %v120
    %v162 = vmul.f32 %v50, %v124
    %v163 = vmul.f32 %v50, %v128
    %v164 = vmul.f32 %v50, %v132
    %v165 = vmul.f32 %v55, %v72
    %v166 = vmul.f32 %v55, %v76
    %v167 = vmul.f32 %v55, %v80
    %v168 = vmul.f32 %v55, %v84
    %v169 = vmul.f32 %v55, %v88
    %v170 = vmul.f32 %v55, %v92
    %v171 = vmul.f32 %v55, %v96
    %v172 = vmul.f32 %v55, %v100
    %v173 = vmul.f32 %v55, %v104
    %v174 = vmul.f32 %v55, %v108
    %v175 = vmul.f32 %v55, %v112
    %v176 = vmul.f32 %v55, %v116
    %v177 = vmul.f32 %v55, %v120
    %v178 = vmul.f32 %v55, %v124
    %v179 = vmul.f32 %v55, %v128
    %v180 = vmul.f32 %v55, %v132
    %v181 = vmul.f32 %v60, %v72
    %v182 = vmul.f32 %v60, %v76
    %v183 = vmul.f32 %v60, %v80
    %v184 = vmul.f32 %v60, %v84
    %v185 = vmul.f32 %v60, %v88
    %v186 = vmul.f32 %v60, %v92
    %v187 = vmul.f32 %v60, %v96
    %v188 = vmul.f32 %v60, %v100
    %v189 = vmul.f32 %v60, %v104
    %v190 = vmul.f32 %v60, %v108
    %v191 = vmul.f32 %v60, %v112
    %v192 = vmul.f32 %v60, %v116
    %v193 = vmul.f32 %v60, %v120
    %v194 = vmul.f32 %v60, %v124
    %v195 = vmul.f32 %v60, %v128
    %v196 = vmul.f32 %v60, %v132
    %v197 = vmul.f32 %v65, %v72
    %v198 = vmul.f32 %v65, %v76
    %v199 = vmul.f32 %v65, %v80
    %v200 = vmul.f32 %v65, %v84
    %v201 = vmul.f32 %v65, %v88
    %v202 = vmul.f32 %v65, %v92
    %v203 = vmul.f32 %v65, %v96
    %v204 = vmul.f32 %v65, %v100
    %v205 = vmul.f32 %v65, %v104
    %v206 = vmul.f32 %v65, %v108
    %v207 = vmul.f32 %v65, %v112
    %v208 = vmul.f32 %v65, %v116
    %v209 = vmul.f32 %v65, %v120
    %v210 = vmul.f32 %v65, %v124
    %v211 = vmul.f32 %v65, %v128
    %v212 = vmul.f32 %v65, %v132
    %213 = vset.pattern.permute.xlu0 1
    %214 = vperm.xlu0 %213, %v43
    %v215 = vpop.permute.xlu0 %214
    %217 = vset.pattern.permute.xlu0 1
    %218 = vperm.xlu0 %217, %v44
    %v219 = vpop.permute.xlu0 %218
    %221 = vset.pattern.permute.xlu0 1
    %222 = vperm.xlu0 %221, %v45
    %v223 = vpop.permute.xlu0 %222
    %225 = vset.pattern.permute.xlu0 1
    %226 = vperm.xlu0 %225, %v46
    %v227 = vpop.permute.xlu0 %226
    %v231 = vlaneseq
    %v232 = vshrl.u32 %v231, 7
    %v233 = vsub.s32 0, %v232
    %v234 = vrot.slane %v41, %v233
    %v235 = vlaneseq
    %v236 = vshrl.u32 %v235, 7
    %v237 = vsub.s32 1, %v236
    %v238 = vrot.slane %v41, %v237
    %v239 = vlaneseq
    %v240 = vshrl.u32 %v239, 7
    %v241 = vsub.s32 2, %v240
    %v242 = vrot.slane %v41, %v241
    %v243 = vlaneseq
    %v244 = vshrl.u32 %v243, 7
    %v245 = vsub.s32 3, %v244
    %v246 = vrot.slane %v41, %v245
    %v247 = vlaneseq
    %v248 = vshrl.u32 %v247, 7
    %v249 = vsub.s32 4, %v248
    %v250 = vrot.slane %v41, %v249
    %v251 = vlaneseq
    %v252 = vshrl.u32 %v251, 7
    %v253 = vsub.s32 5, %v252
    %v254 = vrot.slane %v41, %v253
    %v255 = vlaneseq
    %v256 = vshrl.u32 %v255, 7
    %v257 = vsub.s32 6, %v256
    %v258 = vrot.slane %v41, %v257
    %v259 = vlaneseq
    %v260 = vshrl.u32 %v259, 7
    %v261 = vsub.s32 7, %v260
    %v262 = vrot.slane %v41, %v261
    %v263 = vlaneseq
    %v264 = vshrl.u32 %v263, 7
    %v265 = vsub.s32 0, %v264
    %v266 = vrot.slane %v42, %v265
    %v267 = vlaneseq
    %v268 = vshrl.u32 %v267, 7
    %v269 = vsub.s32 1, %v268
    %v270 = vrot.slane %v42, %v269
    %v271 = vlaneseq
    %v272 = vshrl.u32 %v271, 7
    %v273 = vsub.s32 2, %v272
    %v274 = vrot.slane %v42, %v273
    %v275 = vlaneseq
    %v276 = vshrl.u32 %v275, 7
    %v277 = vsub.s32 3, %v276
    %v278 = vrot.slane %v42, %v277
    %v279 = vlaneseq
    %v280 = vshrl.u32 %v279, 7
    %v281 = vsub.s32 4, %v280
    %v282 = vrot.slane %v42, %v281
    %v283 = vlaneseq
    %v284 = vshrl.u32 %v283, 7
    %v285 = vsub.s32 5, %v284
    %v286 = vrot.slane %v42, %v285
    %v287 = vlaneseq
    %v288 = vshrl.u32 %v287, 7
    %v289 = vsub.s32 6, %v288
    %v290 = vrot.slane %v42, %v289
    %v291 = vlaneseq
    %v292 = vshrl.u32 %v291, 7
    %v293 = vsub.s32 7, %v292
    %v294 = vrot.slane %v42, %v293
    %v311 = vmul.f32 %v215, %v234
    %v312 = vmul.f32 %v215, %v238
    %v313 = vmul.f32 %v215, %v242
    %v314 = vmul.f32 %v215, %v246
    %v315 = vmul.f32 %v215, %v250
    %v316 = vmul.f32 %v215, %v254
    %v317 = vmul.f32 %v215, %v258
    %v318 = vmul.f32 %v215, %v262
    %v319 = vmul.f32 %v215, %v266
    %v320 = vmul.f32 %v215, %v270
    %v321 = vmul.f32 %v215, %v274
    %v322 = vmul.f32 %v215, %v278
    %v323 = vmul.f32 %v215, %v282
    %v324 = vmul.f32 %v215, %v286
    %v325 = vmul.f32 %v215, %v290
    %v326 = vmul.f32 %v215, %v294
    %v327 = vmul.f32 %v219, %v234
    %v328 = vmul.f32 %v219, %v238
    %v329 = vmul.f32 %v219, %v242
    %v330 = vmul.f32 %v219, %v246
    %v331 = vmul.f32 %v219, %v250
    %v332 = vmul.f32 %v219, %v254
    %v333 = vmul.f32 %v219, %v258
    %v334 = vmul.f32 %v219, %v262
    %v335 = vmul.f32 %v219, %v266
    %v336 = vmul.f32 %v219, %v270
    %v337 = vmul.f32 %v219, %v274
    %v338 = vmul.f32 %v219, %v278
    %v339 = vmul.f32 %v219, %v282
    %v340 = vmul.f32 %v219, %v286
    %v341 = vmul.f32 %v219, %v290
    %v342 = vmul.f32 %v219, %v294
    %v343 = vmul.f32 %v223, %v234
    %v344 = vmul.f32 %v223, %v238
    %v345 = vmul.f32 %v223, %v242
    %v346 = vmul.f32 %v223, %v246
    %v347 = vmul.f32 %v223, %v250
    %v348 = vmul.f32 %v223, %v254
    %v349 = vmul.f32 %v223, %v258
    %v350 = vmul.f32 %v223, %v262
    %v351 = vmul.f32 %v223, %v266
    %v352 = vmul.f32 %v223, %v270
    %v353 = vmul.f32 %v223, %v274
    %v354 = vmul.f32 %v223, %v278
    %v355 = vmul.f32 %v223, %v282
    %v356 = vmul.f32 %v223, %v286
    %v357 = vmul.f32 %v223, %v290
    %v358 = vmul.f32 %v223, %v294
    %v359 = vmul.f32 %v227, %v234
    %v360 = vmul.f32 %v227, %v238
    %v361 = vmul.f32 %v227, %v242
    %v362 = vmul.f32 %v227, %v246
    %v363 = vmul.f32 %v227, %v250
    %v364 = vmul.f32 %v227, %v254
    %v365 = vmul.f32 %v227, %v258
    %v366 = vmul.f32 %v227, %v262
    %v367 = vmul.f32 %v227, %v266
    %v368 = vmul.f32 %v227, %v270
    %v369 = vmul.f32 %v227, %v274
    %v370 = vmul.f32 %v227, %v278
    %v371 = vmul.f32 %v227, %v282
    %v372 = vmul.f32 %v227, %v286
    %v373 = vmul.f32 %v227, %v290
    %v374 = vmul.f32 %v227, %v294
    %v375 = vadd.f32 %v149, %v311
    %v376 = vadd.f32 %v150, %v312
    %v377 = vadd.f32 %v151, %v313
    %v378 = vadd.f32 %v152, %v314
    %v379 = vadd.f32 %v153, %v315
    %v380 = vadd.f32 %v154, %v316
    %v381 = vadd.f32 %v155, %v317
    %v382 = vadd.f32 %v156, %v318
    %v383 = vadd.f32 %v157, %v319
    %v384 = vadd.f32 %v158, %v320
    %v385 = vadd.f32 %v159, %v321
    %v386 = vadd.f32 %v160, %v322
    %v387 = vadd.f32 %v161, %v323
    %v388 = vadd.f32 %v162, %v324
    %v389 = vadd.f32 %v163, %v325
    %v390 = vadd.f32 %v164, %v326
    %v391 = vadd.f32 %v165, %v327
    %v392 = vadd.f32 %v166, %v328
    %v393 = vadd.f32 %v167, %v329
    %v394 = vadd.f32 %v168, %v330
    %v395 = vadd.f32 %v169, %v331
    %v396 = vadd.f32 %v170, %v332
    %v397 = vadd.f32 %v171, %v333
    %v398 = vadd.f32 %v172, %v334
    %v399 = vadd.f32 %v173, %v335
    %v400 = vadd.f32 %v174, %v336
    %v401 = vadd.f32 %v175, %v337
    %v402 = vadd.f32 %v176, %v338
    %v403 = vadd.f32 %v177, %v339
    %v404 = vadd.f32 %v178, %v340
    %v405 = vadd.f32 %v179, %v341
    %v406 = vadd.f32 %v180, %v342
    %v407 = vadd.f32 %v181, %v343
    %v408 = vadd.f32 %v182, %v344
    %v409 = vadd.f32 %v183, %v345
    %v410 = vadd.f32 %v184, %v346
    %v411 = vadd.f32 %v185, %v347
    %v412 = vadd.f32 %v186, %v348
    %v413 = vadd.f32 %v187, %v349
    %v414 = vadd.f32 %v188, %v350
    %v415 = vadd.f32 %v189, %v351
    %v416 = vadd.f32 %v190, %v352
    %v417 = vadd.f32 %v191, %v353
    %v418 = vadd.f32 %v192, %v354
    %v419 = vadd.f32 %v193, %v355
    %v420 = vadd.f32 %v194, %v356
    %v421 = vadd.f32 %v195, %v357
    %v422 = vadd.f32 %v196, %v358
    %v423 = vadd.f32 %v197, %v359
    %v424 = vadd.f32 %v198, %v360
    %v425 = vadd.f32 %v199, %v361
    %v426 = vadd.f32 %v200, %v362
    %v427 = vadd.f32 %v201, %v363
    %v428 = vadd.f32 %v202, %v364
    %v429 = vadd.f32 %v203, %v365
    %v430 = vadd.f32 %v204, %v366
    %v431 = vadd.f32 %v205, %v367
    %v432 = vadd.f32 %v206, %v368
    %v433 = vadd.f32 %v207, %v369
    %v434 = vadd.f32 %v208, %v370
    %v435 = vadd.f32 %v209, %v371
    %v436 = vadd.f32 %v210, %v372
    %v437 = vadd.f32 %v211, %v373
    %v438 = vadd.f32 %v212, %v374
    %v439 = vld [vmem:[%s2] sm:$0xff]
    %v440 = vld [vmem:[%s2 + $0x8] sm:$0xff]
    %v441 = vld [vmem:[%s2 + $0x10] sm:$0xff]
    %v442 = vld [vmem:[%s2 + $0x18] sm:$0xff]
    %444 = vset.pattern.permute.xlu0 0
    %445 = vperm.xlu0 %444, %v439
    %v446 = vpop.permute.xlu0 %445
    %449 = vset.pattern.permute.xlu0 0
    %450 = vperm.xlu0 %449, %v440
    %v451 = vpop.permute.xlu0 %450
    %454 = vset.pattern.permute.xlu0 0
    %455 = vperm.xlu0 %454, %v441
    %v456 = vpop.permute.xlu0 %455
    %459 = vset.pattern.permute.xlu0 0
    %460 = vperm.xlu0 %459, %v442
    %v461 = vpop.permute.xlu0 %460
    %v463 = vadd.f32 %v375, %v446
    %v464 = vadd.f32 %v376, %v446
    %v465 = vadd.f32 %v377, %v446
    %v466 = vadd.f32 %v378, %v446
    %v467 = vadd.f32 %v379, %v446
    %v468 = vadd.f32 %v380, %v446
    %v469 = vadd.f32 %v381, %v446
    %v470 = vadd.f32 %v382, %v446
    %v471 = vadd.f32 %v383, %v446
    %v472 = vadd.f32 %v384, %v446
    %v473 = vadd.f32 %v385, %v446
    %v474 = vadd.f32 %v386, %v446
    %v475 = vadd.f32 %v387, %v446
    %v476 = vadd.f32 %v388, %v446
    %v477 = vadd.f32 %v389, %v446
    %v478 = vadd.f32 %v390, %v446
    %v479 = vadd.f32 %v391, %v451
    %v480 = vadd.f32 %v392, %v451
    %v481 = vadd.f32 %v393, %v451
    %v482 = vadd.f32 %v394, %v451
    %v483 = vadd.f32 %v395, %v451
    %v484 = vadd.f32 %v396, %v451
    %v485 = vadd.f32 %v397, %v451
    %v486 = vadd.f32 %v398, %v451
    %v487 = vadd.f32 %v399, %v451
    %v488 = vadd.f32 %v400, %v451
    %v489 = vadd.f32 %v401, %v451
    %v490 = vadd.f32 %v402, %v451
    %v491 = vadd.f32 %v403, %v451
    %v492 = vadd.f32 %v404, %v451
    %v493 = vadd.f32 %v405, %v451
    %v494 = vadd.f32 %v406, %v451
    %v495 = vadd.f32 %v407, %v456
    %v496 = vadd.f32 %v408, %v456
    %v497 = vadd.f32 %v409, %v456
    %v498 = vadd.f32 %v410, %v456
    %v499 = vadd.f32 %v411, %v456
    %v500 = vadd.f32 %v412, %v456
    %v501 = vadd.f32 %v413, %v456
    %v502 = vadd.f32 %v414, %v456
    %v503 = vadd.f32 %v415, %v456
    %v504 = vadd.f32 %v416, %v456
    %v505 = vadd.f32 %v417, %v456
    %v506 = vadd.f32 %v418, %v456
    %v507 = vadd.f32 %v419, %v456
    %v508 = vadd.f32 %v420, %v456
    %v509 = vadd.f32 %v421, %v456
    %v510 = vadd.f32 %v422, %v456
    %v511 = vadd.f32 %v423, %v461
    %v512 = vadd.f32 %v424, %v461
    %v513 = vadd.f32 %v425, %v461
    %v514 = vadd.f32 %v426, %v461
    %v515 = vadd.f32 %v427, %v461
    %v516 = vadd.f32 %v428, %v461
    %v517 = vadd.f32 %v429, %v461
    %v518 = vadd.f32 %v430, %v461
    %v519 = vadd.f32 %v431, %v461
    %v520 = vadd.f32 %v432, %v461
    %v521 = vadd.f32 %v433, %v461
    %v522 = vadd.f32 %v434, %v461
    %v523 = vadd.f32 %v435, %v461
    %v524 = vadd.f32 %v436, %v461
    %v525 = vadd.f32 %v437, %v461
    %v526 = vadd.f32 %v438, %v461
    %v527 = vmax.f32 %v463, 0.0
    %v528 = vmax.f32 %v464, 0.0
    %v529 = vmax.f32 %v465, 0.0
    %v530 = vmax.f32 %v466, 0.0
    %v531 = vmax.f32 %v467, 0.0
    %v532 = vmax.f32 %v468, 0.0
    %v533 = vmax.f32 %v469, 0.0
    %v534 = vmax.f32 %v470, 0.0
    %v535 = vmax.f32 %v471, 0.0
    %v536 = vmax.f32 %v472, 0.0
    %v537 = vmax.f32 %v473, 0.0
    %v538 = vmax.f32 %v474, 0.0
    %v539 = vmax.f32 %v475, 0.0
    %v540 = vmax.f32 %v476, 0.0
    %v541 = vmax.f32 %v477, 0.0
    %v542 = vmax.f32 %v478, 0.0
    %v543 = vmax.f32 %v479, 0.0
    %v544 = vmax.f32 %v480, 0.0
    %v545 = vmax.f32 %v481, 0.0
    %v546 = vmax.f32 %v482, 0.0
    %v547 = vmax.f32 %v483, 0.0
    %v548 = vmax.f32 %v484, 0.0
    %v549 = vmax.f32 %v485, 0.0
    %v550 = vmax.f32 %v486, 0.0
    %v551 = vmax.f32 %v487, 0.0
    %v552 = vmax.f32 %v488, 0.0
    %v553 = vmax.f32 %v489, 0.0
    %v554 = vmax.f32 %v490, 0.0
    %v555 = vmax.f32 %v491, 0.0
    %v556 = vmax.f32 %v492, 0.0
    %v557 = vmax.f32 %v493, 0.0
    %v558 = vmax.f32 %v494, 0.0
    %v559 = vmax.f32 %v495, 0.0
    %v560 = vmax.f32 %v496, 0.0
    %v561 = vmax.f32 %v497, 0.0
    %v562 = vmax.f32 %v498, 0.0
    %v563 = vmax.f32 %v499, 0.0
    %v564 = vmax.f32 %v500, 0.0
    %v565 = vmax.f32 %v501, 0.0
    %v566 = vmax.f32 %v502, 0.0
    %v567 = vmax.f32 %v503, 0.0
    %v568 = vmax.f32 %v504, 0.0
    %v569 = vmax.f32 %v505, 0.0
    %v570 = vmax.f32 %v506, 0.0
    %v571 = vmax.f32 %v507, 0.0
    %v572 = vmax.f32 %v508, 0.0
    %v573 = vmax.f32 %v509, 0.0
    %v574 = vmax.f32 %v510, 0.0
    %v575 = vmax.f32 %v511, 0.0
    %v576 = vmax.f32 %v512, 0.0
    %v577 = vmax.f32 %v513, 0.0
    %v578 = vmax.f32 %v514, 0.0
    %v579 = vmax.f32 %v515, 0.0
    %v580 = vmax.f32 %v516, 0.0
    %v581 = vmax.f32 %v517, 0.0
    %v582 = vmax.f32 %v518, 0.0
    %v583 = vmax.f32 %v519, 0.0
    %v584 = vmax.f32 %v520, 0.0
    %v585 = vmax.f32 %v521, 0.0
    %v586 = vmax.f32 %v522, 0.0
    %v587 = vmax.f32 %v523, 0.0
    %v588 = vmax.f32 %v524, 0.0
    %v589 = vmax.f32 %v525, 0.0
    %v590 = vmax.f32 %v526, 0.0
    %v591 = vld [vmem:[%s3] sm:$0xff]
    %v592 = vld [vmem:[%s3 + $0x8] sm:$0xff]
    %v593 = vld [vmem:[%s3 + $0x10] sm:$0xff]
    %v594 = vld [vmem:[%s3 + $0x18] sm:$0xff]
    %v595 = vld [vmem:[%s3 + $0x20] sm:$0xff]
    %v596 = vld [vmem:[%s3 + $0x28] sm:$0xff]
    %v597 = vld [vmem:[%s3 + $0x30] sm:$0xff]
    %v598 = vld [vmem:[%s3 + $0x38] sm:$0xff]
    %v599 = vld [vmem:[%s4] sm:$0xff]
    %v600 = vld [vmem:[%s4 + $0x8] sm:$0xff]
    %v601 = vld [vmem:[%s4 + $0x10] sm:$0xff]
    %v602 = vld [vmem:[%s4 + $0x18] sm:$0xff]
    %v603 = vld [vmem:[%s4 + $0x20] sm:$0xff]
    %v604 = vld [vmem:[%s4 + $0x28] sm:$0xff]
    %v605 = vld [vmem:[%s4 + $0x30] sm:$0xff]
    %v606 = vld [vmem:[%s4 + $0x38] sm:$0xff]
    %608 = vset.pattern.permute.xlu0 0
    %609 = vperm.xlu0 %608, %v599
    %v610 = vpop.permute.xlu0 %609
    %613 = vset.pattern.permute.xlu0 0
    %614 = vperm.xlu0 %613, %v600
    %v615 = vpop.permute.xlu0 %614
    %618 = vset.pattern.permute.xlu0 0
    %619 = vperm.xlu0 %618, %v601
    %v620 = vpop.permute.xlu0 %619
    %623 = vset.pattern.permute.xlu0 0
    %624 = vperm.xlu0 %623, %v602
    %v625 = vpop.permute.xlu0 %624
    %628 = vset.pattern.permute.xlu0 0
    %629 = vperm.xlu0 %628, %v603
    %v630 = vpop.permute.xlu0 %629
    %633 = vset.pattern.permute.xlu0 0
    %634 = vperm.xlu0 %633, %v604
    %v635 = vpop.permute.xlu0 %634
    %638 = vset.pattern.permute.xlu0 0
    %639 = vperm.xlu0 %638, %v605
    %v640 = vpop.permute.xlu0 %639
    %643 = vset.pattern.permute.xlu0 0
    %644 = vperm.xlu0 %643, %v606
    %v645 = vpop.permute.xlu0 %644
    %vm647 = vcmask 261120
    %v649 = vsel %vm647, %v591, 0
    %v652 = vsel %vm647, %v592, 0
    %v655 = vsel %vm647, %v593, 0
    %v658 = vsel %vm647, %v594, 0
    %v661 = vsel %vm647, %v595, 0
    %v664 = vsel %vm647, %v596, 0
    %v667 = vsel %vm647, %v597, 0
    %v670 = vsel %vm647, %v598, 0
    %672 = vmatprep.subr.mxu0 %v528
    %673 = vmatpush1.msra.mxu0 %v527
    %674 = vmatprep.subr.mxu0 %v544
    %675 = vmatpush1.msra.mxu0 %v543
    %676 = vmatprep.subr.mxu0 %v560
    %677 = vmatpush1.msra.mxu0 %v559
    %678 = vmatprep.subr.mxu0 %v576
    %679 = vmatpush1.msra.mxu0 %v575
    %680 = vmatprep.subr.mxu0 0.0
    %681 = vmatpush1.msra.mxu0 0.0
    %682 = vmatprep.subr.mxu0 0.0
    %683 = vmatpush1.msra.mxu0 0.0
    %684 = vmatprep.subr.mxu0 0.0
    %685 = vmatpush1.msra.mxu0 0.0
    %686 = vmatprep.subr.mxu0 0.0
    %687 = vmatpush1.msra.mxu0 0.0
    %688 = vmatprep.subr.mxu0 0.0
    %689 = vmatpush1.msra.mxu0 0.0
    %690 = vmatprep.subr.mxu0 0.0
    %691 = vmatpush1.msra.mxu0 0.0
    %692 = vmatprep.subr.mxu0 0.0
    %693 = vmatpush1.msra.mxu0 0.0
    %694 = vmatprep.subr.mxu0 0.0
    %695 = vmatpush1.msra.mxu0 0.0
    %696 = vmatprep.subr.mxu0 0.0
    %697 = vmatpush1.msra.mxu0 0.0
    %698 = vmatprep.subr.mxu0 0.0
    %699 = vmatpush1.msra.mxu0 0.0
    %700 = vmatprep.subr.mxu0 0.0
    %701 = vmatpush1.msra.mxu0 0.0
    %702 = vmatprep.subr.mxu0 0.0
    %703 = vmatpush1.msra.mxu0 0.0
    %704 = vmatprep.subr.mxu0 0.0
    %705 = vmatpush1.msra.mxu0 0.0
    %706 = vmatprep.subr.mxu0 0.0
    %707 = vmatpush1.msra.mxu0 0.0
    %708 = vmatprep.subr.mxu0 0.0
    %709 = vmatpush1.msra.mxu0 0.0
    %710 = vmatprep.subr.mxu0 0.0
    %711 = vmatpush1.msra.mxu0 0.0
    %712 = vmatprep.subr.mxu0 0.0
    %713 = vmatpush1.msra.mxu0 0.0
    %714 = vmatprep.subr.mxu0 0.0
    %715 = vmatpush1.msra.mxu0 0.0
    %716 = vmatprep.subr.mxu0 0.0
    %717 = vmatpush1.msra.mxu0 0.0
    %718 = vmatprep.subr.mxu0 0.0
    %719 = vmatpush1.msra.mxu0 0.0
    %720 = vmatprep.subr.mxu0 0.0
    %721 = vmatpush1.msra.mxu0 0.0
    %722 = vmatprep.subr.mxu0 0.0
    %723 = vmatpush1.msra.mxu0 0.0
    %724 = vmatprep.subr.mxu0 0.0
    %725 = vmatpush1.msra.mxu0 0.0
    %726 = vmatprep.subr.mxu0 0.0
    %727 = vmatpush1.msra.mxu0 0.0
    %728 = vmatprep.subr.mxu0 0.0
    %729 = vmatpush1.msra.mxu0 0.0
    %730 = vmatprep.subr.mxu0 0.0
    %731 = vmatpush1.msra.mxu0 0.0
    %732 = vmatprep.subr.mxu0 0.0
    %733 = vmatpush1.msra.mxu0 0.0
    %734 = vmatprep.subr.mxu0 0.0
    %735 = vmatpush1.msra.mxu0 0.0
    %736 = vmatprep.mubr.f32.mxu0 0.0
    %737 = vmatmul.mubr.f32.gmra.mrb[0].mxu0 %v649
    %v738 = vpop.f32.mrb[0].mxu0
    %v739 = vadd.f32 %v610, %v738
    %v740 = vpop.f32.mrb[0].mxu0
    %v741 = vadd.f32 %v610, %v740
    %742 = vmatprep.mubr.f32.mxu0 0.0
    %743 = vmatmul.mubr.f32.gmra.mrb[0].mxu0 %v652
    %v744 = vpop.f32.mrb[0].mxu0
    %v745 = vadd.f32 %v615, %v744
    %v746 = vpop.f32.mrb[0].mxu0
    %v747 = vadd.f32 %v615, %v746
    %748 = vmatprep.mubr.f32.mxu0 0.0
    %749 = vmatmul.mubr.f32.gmra.mrb[0].mxu0 %v655
    %v750 = vpop.f32.mrb[0].mxu0
    %v751 = vadd.f32 %v620, %v750
    %v752 = vpop.f32.mrb[0].mxu0
    %v753 = vadd.f32 %v620, %v752
    %754 = vmatprep.mubr.f32.mxu0 0.0
    %755 = vmatmul.mubr.f32.gmra.mrb[0].mxu0 %v658
    %v756 = vpop.f32.mrb[0].mxu0
    %v757 = vadd.f32 %v625, %v756
    %v758 = vpop.f32.mrb[0].mxu0
    %v759 = vadd.f32 %v625, %v758
    %760 = vmatprep.mubr.f32.mxu0 0.0
    %761 = vmatmul.mubr.f32.gmra.mrb[0].mxu0 %v661
    %v762 = vpop.f32.mrb[0].mxu0
    %v763 = vadd.f32 %v630, %v762
    %v764 = vpop.f32.mrb[0].mxu0
    %v765 = vadd.f32 %v630, %v764
    %766 = vmatprep.mubr.f32.mxu0 0.0
    %767 = vmatmul.mubr.f32.gmra.mrb[0].mxu0 %v664
    %v768 = vpop.f32.mrb[0].mxu0
    %v769 = vadd.f32 %v635, %v768
    %v770 = vpop.f32.mrb[0].mxu0
    %v771 = vadd.f32 %v635, %v770
    %772 = vmatprep.mubr.f32.mxu0 0.0
    %773 = vmatmul.mubr.f32.gmra.mrb[0].mxu0 %v667
    %v774 = vpop.f32.mrb[0].mxu0
    %v775 = vadd.f32 %v640, %v774
    %v776 = vpop.f32.mrb[0].mxu0
    %v777 = vadd.f32 %v640, %v776
    %778 = vmatprep.mubr.f32.mxu0 0.0
    %779 = vmatmul.mubr.f32.gmra.mrb[0].mxu0 %v670
    %v780 = vpop.f32.mrb[0].mxu0
    %v781 = vadd.f32 %v645, %v780
    %v782 = vpop.f32.mrb[0].mxu0
    %v783 = vadd.f32 %v645, %v782
    %784 = vdwg.mxu0
    %785 = vmatprep.subr.mxu0 %v530
    %786 = vmatpush1.msra.mxu0 %v529
    %787 = vmatprep.subr.mxu0 %v546
    %788 = vmatpush1.msra.mxu0 %v545
    %789 = vmatprep.subr.mxu0 %v562
    %790 = vmatpush1.msra.mxu0 %v561
    %791 = vmatprep.subr.mxu0 %v578
    %792 = vmatpush1.msra.mxu0 %v577
    %793 = vmatprep.subr.mxu0 0.0
    %794 = vmatpush1.msra.mxu0 0.0
    %795 = vmatprep.subr.mxu0 0.0
    %796 = vmatpush1.msra.mxu0 0.0
    %797 = vmatprep.subr.mxu0 0.0
    %798 = vmatpush1.msra.mxu0 0.0
    %799 = vmatprep.subr.mxu0 0.0
    %800 = vmatpush1.msra.mxu0 0.0
    %801 = vmatprep.subr.mxu0 0.0
    %802 = vmatpush1.msra.mxu0 0.0
    %803 = vmatprep.subr.mxu0 0.0
    %804 = vmatpush1.msra.mxu0 0.0
    %805 = vmatprep.subr.mxu0 0.0
    %806 = vmatpush1.msra.mxu0 0.0
    %807 = vmatprep.subr.mxu0 0.0
    %808 = vmatpush1.msra.mxu0 0.0
    %809 = vmatprep.subr.mxu0 0.0
    %810 = vmatpush1.msra.mxu0 0.0
    %811 = vmatprep.subr.mxu0 0.0
    %812 = vmatpush1.msra.mxu0 0.0
    %813 = vmatprep.subr.mxu0 0.0
    %814 = vmatpush1.msra.mxu0 0.0
    %815 = vmatprep.subr.mxu0 0.0
    %816 = vmatpush1.msra.mxu0 0.0
    %817 = vmatprep.subr.mxu0 0.0
    %818 = vmatpush1.msra.mxu0 0.0
    %819 = vmatprep.subr.mxu0 0.0
    %820 = vmatpush1.msra.mxu0 0.0
    %821 = vmatprep.subr.mxu0 0.0
    %822 = vmatpush1.msra.mxu0 0.0
    %823 = vmatprep.subr.mxu0 0.0
    %824 = vmatpush1.msra.mxu0 0.0
    %825 = vmatprep.subr.mxu0 0.0
    %826 = vmatpush1.msra.mxu0 0.0
    %827 = vmatprep.subr.mxu0 0.0
    %828 = vmatpush1.msra.mxu0 0.0
    %829 = vmatprep.subr.mxu0 0.0
    %830 = vmatpush1.msra.mxu0 0.0
    %831 = vmatprep.subr.mxu0 0.0
    %832 = vmatpush1.msra.mxu0 0.0
    %833 = vmatprep.subr.mxu0 0.0
    %834 = vmatpush1.msra.mxu0 0.0
    %835 = vmatprep.subr.mxu0 0.0
    %836 = vmatpush1.msra.mxu0 0.0
    %837 = vmatprep.subr.mxu0 0.0
    %838 = vmatpush1.msra.mxu0 0.0
    %839 = vmatprep.subr.mxu0 0.0
    %840 = vmatpush1.msra.mxu0 0.0
    %841 = vmatprep.subr.mxu0 0.0
    %842 = vmatpush1.msra.mxu0 0.0
    %843 = vmatprep.subr.mxu0 0.0
    %844 = vmatpush1.msra.mxu0 0.0
    %845 = vmatprep.subr.mxu0 0.0
    %846 = vmatpush1.msra.mxu0 0.0
    %847 = vmatprep.subr.mxu0 0.0
    %848 = vmatpush1.msra.mxu0 0.0
    %849 = vmatprep.mubr.f32.mxu0 0.0
    %850 = vmatmul.mubr.f32.gmra.mrb[0].mxu0 %v649
    %v851 = vpop.f32.mrb[0].mxu0
    %v852 = vadd.f32 %v610, %v851
    %v853 = vpop.f32.mrb[0].mxu0
    %v854 = vadd.f32 %v610, %v853
    %855 = vmatprep.mubr.f32.mxu0 0.0
    %856 = vmatmul.mubr.f32.gmra.mrb[0].mxu0 %v652
    %v857 = vpop.f32.mrb[0].mxu0
    %v858 = vadd.f32 %v615, %v857
    %v859 = vpop.f32.mrb[0].mxu0
    %v860 = vadd.f32 %v615, %v859
    %861 = vmatprep.mubr.f32.mxu0 0.0
    %862 = vmatmul.mubr.f32.gmra.mrb[0].mxu0 %v655
    %v863 = vpop.f32.mrb[0].mxu0
    %v864 = vadd.f32 %v620, %v863
    %v865 = vpop.f32.mrb[0].mxu0
    %v866 = vadd.f32 %v620, %v865
    %867 = vmatprep.mubr.f32.mxu0 0.0
    %868 = vmatmul.mubr.f32.gmra.mrb[0].mxu0 %v658
    %v869 = vpop.f32.mrb[0].mxu0
    %v870 = vadd.f32 %v625, %v869
    %v871 = vpop.f32.mrb[0].mxu0
    %v872 = vadd.f32 %v625, %v871
    %873 = vmatprep.mubr.f32.mxu0 0.0
    %874 = vmatmul.mubr.f32.gmra.mrb[0].mxu0 %v661
    %v875 = vpop.f32.mrb[0].mxu0
    %v876 = vadd.f32 %v630, %v875
    %v877 = vpop.f32.mrb[0].mxu0
    %v878 = vadd.f32 %v630, %v877
    %879 = vmatprep.mubr.f32.mxu0 0.0
    %880 = vmatmul.mubr.f32.gmra.mrb[0].mxu0 %v664
    %v881 = vpop.f32.mrb[0].mxu0
    %v882 = vadd.f32 %v635, %v881
    %v883 = vpop.f32.mrb[0].mxu0
    %v884 = vadd.f32 %v635, %v883
    %885 = vmatprep.mubr.f32.mxu0 0.0
    %886 = vmatmul.mubr.f32.gmra.mrb[0].mxu0 %v667
    %v887 = vpop.f32.mrb[0].mxu0
    %v888 = vadd.f32 %v640, %v887
    %v889 = vpop.f32.mrb[0].mxu0
    %v890 = vadd.f32 %v640, %v889
    %891 = vmatprep.mubr.f32.mxu0 0.0
    %892 = vmatmul.mubr.f32.gmra.mrb[0].mxu0 %v670
    %v893 = vpop.f32.mrb[0].mxu0
    %v894 = vadd.f32 %v645, %v893
    %v895 = vpop.f32.mrb[0].mxu0
    %v896 = vadd.f32 %v645, %v895
    %897 = vdwg.mxu0
    %898 = vmatprep.subr.mxu0 %v532
    %899 = vmatpush1.msra.mxu0 %v531
    %900 = vmatprep.subr.mxu0 %v548
    %901 = vmatpush1.msra.mxu0 %v547
    %902 = vmatprep.subr.mxu0 %v564
    %903 = vmatpush1.msra.mxu0 %v563
    %904 = vmatprep.subr.mxu0 %v580
    %905 = vmatpush1.msra.mxu0 %v579
    %906 = vmatprep.subr.mxu0 0.0
    %907 = vmatpush1.msra.mxu0 0.0
    %908 = vmatprep.subr.mxu0 0.0
    %909 = vmatpush1.msra.mxu0 0.0
    %910 = vmatprep.subr.mxu0 0.0
    %911 = vmatpush1.msra.mxu0 0.0
    %912 = vmatprep.subr.mxu0 0.0
    %913 = vmatpush1.msra.mxu0 0.0
    %914 = vmatprep.subr.mxu0 0.0
    %915 = vmatpush1.msra.mxu0 0.0
    %916 = vmatprep.subr.mxu0 0.0
    %917 = vmatpush1.msra.mxu0 0.0
    %918 = vmatprep.subr.mxu0 0.0
    %919 = vmatpush1.msra.mxu0 0.0
    %920 = vmatprep.subr.mxu0 0.0
    %921 = vmatpush1.msra.mxu0 0.0
    %922 = vmatprep.subr.mxu0 0.0
    %923 = vmatpush1.msra.mxu0 0.0
    %924 = vmatprep.subr.mxu0 0.0
    %925 = vmatpush1.msra.mxu0 0.0
    %926 = vmatprep.subr.mxu0 0.0
    %927 = vmatpush1.msra.mxu0 0.0
    %928 = vmatprep.subr.mxu0 0.0
    %929 = vmatpush1.msra.mxu0 0.0
    %930 = vmatprep.subr.mxu0 0.0
    %931 = vmatpush1.msra.mxu0 0.0
    %932 = vmatprep.subr.mxu0 0.0
    %933 = vmatpush1.msra.mxu0 0.0
    %934 = vmatprep.subr.mxu0 0.0
    %935 = vmatpush1.msra.mxu0 0.0
    %936 = vmatprep.subr.mxu0 0.0
    %937 = vmatpush1.msra.mxu0 0.0
    %938 = vmatprep.subr.mxu0 0.0
    %939 = vmatpush1.msra.mxu0 0.0
    %940 = vmatprep.subr.mxu0 0.0
    %941 = vmatpush1.msra.mxu0 0.0
    %942 = vmatprep.subr.mxu0 0.0
    %943 = vmatpush1.msra.mxu0 0.0
    %944 = vmatprep.subr.mxu0 0.0
    %945 = vmatpush1.msra.mxu0 0.0
    %946 = vmatprep.subr.mxu0 0.0
    %947 = vmatpush1.msra.mxu0 0.0
    %948 = vmatprep.subr.mxu0 0.0
    %949 = vmatpush1.msra.mxu0 0.0
    %950 = vmatprep.subr.mxu0 0.0
    %951 = vmatpush1.msra.mxu0 0.0
    %952 = vmatprep.subr.mxu0 0.0
    %953 = vmatpush1.msra.mxu0 0.0
    %954 = vmatprep.subr.mxu0 0.0
    %955 = vmatpush1.msra.mxu0 0.0
    %956 = vmatprep.subr.mxu0 0.0
    %957 = vmatpush1.msra.mxu0 0.0
    %958 = vmatprep.subr.mxu0 0.0
    %959 = vmatpush1.msra.mxu0 0.0
    %960 = vmatprep.subr.mxu0 0.0
    %961 = vmatpush1.msra.mxu0 0.0
    %962 = vmatprep.mubr.f32.mxu0 0.0
    %963 = vmatmul.mubr.f32.gmra.mrb[0].mxu0 %v649
    %v964 = vpop.f32.mrb[0].mxu0
    %v965 = vadd.f32 %v610, %v964
    %v966 = vpop.f32.mrb[0].mxu0
    %v967 = vadd.f32 %v610, %v966
    %968 = vmatprep.mubr.f32.mxu0 0.0
    %969 = vmatmul.mubr.f32.gmra.mrb[0].mxu0 %v652
    %v970 = vpop.f32.mrb[0].mxu0
    %v971 = vadd.f32 %v615, %v970
    %v972 = vpop.f32.mrb[0].mxu0
    %v973 = vadd.f32 %v615, %v972
    %974 = vmatprep.mubr.f32.mxu0 0.0
    %975 = vmatmul.mubr.f32.gmra.mrb[0].mxu0 %v655
    %v976 = vpop.f32.mrb[0].mxu0
    %v977 = vadd.f32 %v620, %v976
    %v978 = vpop.f32.mrb[0].mxu0
    %v979 = vadd.f32 %v620, %v978
    %980 = vmatprep.mubr.f32.mxu0 0.0
    %981 = vmatmul.mubr.f32.gmra.mrb[0].mxu0 %v658
    %v982 = vpop.f32.mrb[0].mxu0
    %v983 = vadd.f32 %v625, %v982
    %v984 = vpop.f32.mrb[0].mxu0
    %v985 = vadd.f32 %v625, %v984
    %986 = vmatprep.mubr.f32.mxu0 0.0
    %987 = vmatmul.mubr.f32.gmra.mrb[0].mxu0 %v661
    %v988 = vpop.f32.mrb[0].mxu0
    %v989 = vadd.f32 %v630, %v988
    %v990 = vpop.f32.mrb[0].mxu0
    %v991 = vadd.f32 %v630, %v990
    %992 = vmatprep.mubr.f32.mxu0 0.0
    %993 = vmatmul.mubr.f32.gmra.mrb[0].mxu0 %v664
    %v994 = vpop.f32.mrb[0].mxu0
    %v995 = vadd.f32 %v635, %v994
    %v996 = vpop.f32.mrb[0].mxu0
    %v997 = vadd.f32 %v635, %v996
    %998 = vmatprep.mubr.f32.mxu0 0.0
    %999 = vmatmul.mubr.f32.gmra.mrb[0].mxu0 %v667
    %v1000 = vpop.f32.mrb[0].mxu0
    %v1001 = vadd.f32 %v640, %v1000
    %v1002 = vpop.f32.mrb[0].mxu0
    %v1003 = vadd.f32 %v640, %v1002
    %1004 = vmatprep.mubr.f32.mxu0 0.0
    %1005 = vmatmul.mubr.f32.gmra.mrb[0].mxu0 %v670
    %v1006 = vpop.f32.mrb[0].mxu0
    %v1007 = vadd.f32 %v645, %v1006
    %v1008 = vpop.f32.mrb[0].mxu0
    %v1009 = vadd.f32 %v645, %v1008
    %1010 = vdwg.mxu0
    %1011 = vmatprep.subr.mxu0 %v534
    %1012 = vmatpush1.msra.mxu0 %v533
    %1013 = vmatprep.subr.mxu0 %v550
    %1014 = vmatpush1.msra.mxu0 %v549
    %1015 = vmatprep.subr.mxu0 %v566
    %1016 = vmatpush1.msra.mxu0 %v565
    %1017 = vmatprep.subr.mxu0 %v582
    %1018 = vmatpush1.msra.mxu0 %v581
    %1019 = vmatprep.subr.mxu0 0.0
    %1020 = vmatpush1.msra.mxu0 0.0
    %1021 = vmatprep.subr.mxu0 0.0
    %1022 = vmatpush1.msra.mxu0 0.0
    %1023 = vmatprep.subr.mxu0 0.0
    %1024 = vmatpush1.msra.mxu0 0.0
    %1025 = vmatprep.subr.mxu0 0.0
    %1026 = vmatpush1.msra.mxu0 0.0
    %1027 = vmatprep.subr.mxu0 0.0
    %1028 = vmatpush1.msra.mxu0 0.0
    %1029 = vmatprep.subr.mxu0 0.0
    %1030 = vmatpush1.msra.mxu0 0.0
    %1031 = vmatprep.subr.mxu0 0.0
    %1032 = vmatpush1.msra.mxu0 0.0
    %1033 = vmatprep.subr.mxu0 0.0
    %1034 = vmatpush1.msra.mxu0 0.0
    %1035 = vmatprep.subr.mxu0 0.0
    %1036 = vmatpush1.msra.mxu0 0.0
    %1037 = vmatprep.subr.mxu0 0.0
    %1038 = vmatpush1.msra.mxu0 0.0
    %1039 = vmatprep.subr.mxu0 0.0
    %1040 = vmatpush1.msra.mxu0 0.0
    %1041 = vmatprep.subr.mxu0 0.0
    %1042 = vmatpush1.msra.mxu0 0.0
    %1043 = vmatprep.subr.mxu0 0.0
    %1044 = vmatpush1.msra.mxu0 0.0
    %1045 = vmatprep.subr.mxu0 0.0
    %1046 = vmatpush1.msra.mxu0 0.0
    %1047 = vmatprep.subr.mxu0 0.0
    %1048 = vmatpush1.msra.mxu0 0.0
    %1049 = vmatprep.subr.mxu0 0.0
    %1050 = vmatpush1.msra.mxu0 0.0
    %1051 = vmatprep.subr.mxu0 0.0
    %1052 = vmatpush1.msra.mxu0 0.0
    %1053 = vmatprep.subr.mxu0 0.0
    %1054 = vmatpush1.msra.mxu0 0.0
    %1055 = vmatprep.subr.mxu0 0.0
    %1056 = vmatpush1.msra.mxu0 0.0
    %1057 = vmatprep.subr.mxu0 0.0
    %1058 = vmatpush1.msra.mxu0 0.0
    %1059 = vmatprep.subr.mxu0 0.0
    %1060 = vmatpush1.msra.mxu0 0.0
    %1061 = vmatprep.subr.mxu0 0.0
    %1062 = vmatpush1.msra.mxu0 0.0
    %1063 = vmatprep.subr.mxu0 0.0
    %1064 = vmatpush1.msra.mxu0 0.0
    %1065 = vmatprep.subr.mxu0 0.0
    %1066 = vmatpush1.msra.mxu0 0.0
    %1067 = vmatprep.subr.mxu0 0.0
    %1068 = vmatpush1.msra.mxu0 0.0
    %1069 = vmatprep.subr.mxu0 0.0
    %1070 = vmatpush1.msra.mxu0 0.0
    %1071 = vmatprep.subr.mxu0 0.0
    %1072 = vmatpush1.msra.mxu0 0.0
    %1073 = vmatprep.subr.mxu0 0.0
    %1074 = vmatpush1.msra.mxu0 0.0
    %1075 = vmatprep.mubr.f32.mxu0 0.0
    %1076 = vmatmul.mubr.f32.gmra.mrb[0].mxu0 %v649
    %v1077 = vpop.f32.mrb[0].mxu0
    %v1078 = vadd.f32 %v610, %v1077
    %v1079 = vpop.f32.mrb[0].mxu0
    %v1080 = vadd.f32 %v610, %v1079
    %1081 = vmatprep.mubr.f32.mxu0 0.0
    %1082 = vmatmul.mubr.f32.gmra.mrb[0].mxu0 %v652
    %v1083 = vpop.f32.mrb[0].mxu0
    %v1084 = vadd.f32 %v615, %v1083
    %v1085 = vpop.f32.mrb[0].mxu0
    %v1086 = vadd.f32 %v615, %v1085
    %1087 = vmatprep.mubr.f32.mxu0 0.0
    %1088 = vmatmul.mubr.f32.gmra.mrb[0].mxu0 %v655
    %v1089 = vpop.f32.mrb[0].mxu0
    %v1090 = vadd.f32 %v620, %v1089
    %v1091 = vpop.f32.mrb[0].mxu0
    %v1092 = vadd.f32 %v620, %v1091
    %1093 = vmatprep.mubr.f32.mxu0 0.0
    %1094 = vmatmul.mubr.f32.gmra.mrb[0].mxu0 %v658
    %v1095 = vpop.f32.mrb[0].mxu0
    %v1096 = vadd.f32 %v625, %v1095
    %v1097 = vpop.f32.mrb[0].mxu0
    %v1098 = vadd.f32 %v625, %v1097
    %1099 = vmatprep.mubr.f32.mxu0 0.0
    %1100 = vmatmul.mubr.f32.gmra.mrb[0].mxu0 %v661
    %v1101 = vpop.f32.mrb[0].mxu0
    %v1102 = vadd.f32 %v630, %v1101
    %v1103 = vpop.f32.mrb[0].mxu0
    %v1104 = vadd.f32 %v630, %v1103
    %1105 = vmatprep.mubr.f32.mxu0 0.0
    %1106 = vmatmul.mubr.f32.gmra.mrb[0].mxu0 %v664
    %v1107 = vpop.f32.mrb[0].mxu0
    %v1108 = vadd.f32 %v635, %v1107
    %v1109 = vpop.f32.mrb[0].mxu0
    %v1110 = vadd.f32 %v635, %v1109
    %1111 = vmatprep.mubr.f32.mxu0 0.0
    %1112 = vmatmul.mubr.f32.gmra.mrb[0].mxu0 %v667
    %v1113 = vpop.f32.mrb[0].mxu0
    %v1114 = vadd.f32 %v640, %v1113
    %v1115 = vpop.f32.mrb[0].mxu0
    %v1116 = vadd.f32 %v640, %v1115
    %1117 = vmatprep.mubr.f32.mxu0 0.0
    %1118 = vmatmul.mubr.f32.gmra.mrb[0].mxu0 %v670
    %v1119 = vpop.f32.mrb[0].mxu0
    %v1120 = vadd.f32 %v645, %v1119
    %v1121 = vpop.f32.mrb[0].mxu0
    %v1122 = vadd.f32 %v645, %v1121
    %1123 = vdwg.mxu0
    %1124 = vmatprep.subr.mxu0 %v536
    %1125 = vmatpush1.msra.mxu0 %v535
    %1126 = vmatprep.subr.mxu0 %v552
    %1127 = vmatpush1.msra.mxu0 %v551
    %1128 = vmatprep.subr.mxu0 %v568
    %1129 = vmatpush1.msra.mxu0 %v567
    %1130 = vmatprep.subr.mxu0 %v584
    %1131 = vmatpush1.msra.mxu0 %v583
    %1132 = vmatprep.subr.mxu0 0.0
    %1133 = vmatpush1.msra.mxu0 0.0
    %1134 = vmatprep.subr.mxu0 0.0
    %1135 = vmatpush1.msra.mxu0 0.0
    %1136 = vmatprep.subr.mxu0 0.0
    %1137 = vmatpush1.msra.mxu0 0.0
    %1138 = vmatprep.subr.mxu0 0.0
    %1139 = vmatpush1.msra.mxu0 0.0
    %1140 = vmatprep.subr.mxu0 0.0
    %1141 = vmatpush1.msra.mxu0 0.0
    %1142 = vmatprep.subr.mxu0 0.0
    %1143 = vmatpush1.msra.mxu0 0.0
    %1144 = vmatprep.subr.mxu0 0.0
    %1145 = vmatpush1.msra.mxu0 0.0
    %1146 = vmatprep.subr.mxu0 0.0
    %1147 = vmatpush1.msra.mxu0 0.0
    %1148 = vmatprep.subr.mxu0 0.0
    %1149 = vmatpush1.msra.mxu0 0.0
    %1150 = vmatprep.subr.mxu0 0.0
    %1151 = vmatpush1.msra.mxu0 0.0
    %1152 = vmatprep.subr.mxu0 0.0
    %1153 = vmatpush1.msra.mxu0 0.0
    %1154 = vmatprep.subr.mxu0 0.0
    %1155 = vmatpush1.msra.mxu0 0.0
    %1156 = vmatprep.subr.mxu0 0.0
    %1157 = vmatpush1.msra.mxu0 0.0
    %1158 = vmatprep.subr.mxu0 0.0
    %1159 = vmatpush1.msra.mxu0 0.0
    %1160 = vmatprep.subr.mxu0 0.0
    %1161 = vmatpush1.msra.mxu0 0.0
    %1162 = vmatprep.subr.mxu0 0.0
    %1163 = vmatpush1.msra.mxu0 0.0
    %1164 = vmatprep.subr.mxu0 0.0
    %1165 = vmatpush1.msra.mxu0 0.0
    %1166 = vmatprep.subr.mxu0 0.0
    %1167 = vmatpush1.msra.mxu0 0.0
    %1168 = vmatprep.subr.mxu0 0.0
    %1169 = vmatpush1.msra.mxu0 0.0
    %1170 = vmatprep.subr.mxu0 0.0
    %1171 = vmatpush1.msra.mxu0 0.0
    %1172 = vmatprep.subr.mxu0 0.0
    %1173 = vmatpush1.msra.mxu0 0.0
    %1174 = vmatprep.subr.mxu0 0.0
    %1175 = vmatpush1.msra.mxu0 0.0
    %1176 = vmatprep.subr.mxu0 0.0
    %1177 = vmatpush1.msra.mxu0 0.0
    %1178 = vmatprep.subr.mxu0 0.0
    %1179 = vmatpush1.msra.mxu0 0.0
    %1180 = vmatprep.subr.mxu0 0.0
    %1181 = vmatpush1.msra.mxu0 0.0
    %1182 = vmatprep.subr.mxu0 0.0
    %1183 = vmatpush1.msra.mxu0 0.0
    %1184 = vmatprep.subr.mxu0 0.0
    %1185 = vmatpush1.msra.mxu0 0.0
    %1186 = vmatprep.subr.mxu0 0.0
    %1187 = vmatpush1.msra.mxu0 0.0
    %1188 = vmatprep.mubr.f32.mxu0 0.0
    %1189 = vmatmul.mubr.f32.gmra.mrb[0].mxu0 %v649
    %v1190 = vpop.f32.mrb[0].mxu0
    %v1191 = vadd.f32 %v610, %v1190
    %v1192 = vpop.f32.mrb[0].mxu0
    %v1193 = vadd.f32 %v610, %v1192
    %1194 = vmatprep.mubr.f32.mxu0 0.0
    %1195 = vmatmul.mubr.f32.gmra.mrb[0].mxu0 %v652
    %v1196 = vpop.f32.mrb[0].mxu0
    %v1197 = vadd.f32 %v615, %v1196
    %v1198 = vpop.f32.mrb[0].mxu0
    %v1199 = vadd.f32 %v615, %v1198
    %1200 = vmatprep.mubr.f32.mxu0 0.0
    %1201 = vmatmul.mubr.f32.gmra.mrb[0].mxu0 %v655
    %v1202 = vpop.f32.mrb[0].mxu0
    %v1203 = vadd.f32 %v620, %v1202
    %v1204 = vpop.f32.mrb[0].mxu0
    %v1205 = vadd.f32 %v620, %v1204
    %1206 = vmatprep.mubr.f32.mxu0 0.0
    %1207 = vmatmul.mubr.f32.gmra.mrb[0].mxu0 %v658
    %v1208 = vpop.f32.mrb[0].mxu0
    %v1209 = vadd.f32 %v625, %v1208
    %v1210 = vpop.f32.mrb[0].mxu0
    %v1211 = vadd.f32 %v625, %v1210
    %1212 = vmatprep.mubr.f32.mxu0 0.0
    %1213 = vmatmul.mubr.f32.gmra.mrb[0].mxu0 %v661
    %v1214 = vpop.f32.mrb[0].mxu0
    %v1215 = vadd.f32 %v630, %v1214
    %v1216 = vpop.f32.mrb[0].mxu0
    %v1217 = vadd.f32 %v630, %v1216
    %1218 = vmatprep.mubr.f32.mxu0 0.0
    %1219 = vmatmul.mubr.f32.gmra.mrb[0].mxu0 %v664
    %v1220 = vpop.f32.mrb[0].mxu0
    %v1221 = vadd.f32 %v635, %v1220
    %v1222 = vpop.f32.mrb[0].mxu0
    %v1223 = vadd.f32 %v635, %v1222
    %1224 = vmatprep.mubr.f32.mxu0 0.0
    %1225 = vmatmul.mubr.f32.gmra.mrb[0].mxu0 %v667
    %v1226 = vpop.f32.mrb[0].mxu0
    %v1227 = vadd.f32 %v640, %v1226
    %v1228 = vpop.f32.mrb[0].mxu0
    %v1229 = vadd.f32 %v640, %v1228
    %1230 = vmatprep.mubr.f32.mxu0 0.0
    %1231 = vmatmul.mubr.f32.gmra.mrb[0].mxu0 %v670
    %v1232 = vpop.f32.mrb[0].mxu0
    %v1233 = vadd.f32 %v645, %v1232
    %v1234 = vpop.f32.mrb[0].mxu0
    %v1235 = vadd.f32 %v645, %v1234
    %1236 = vdwg.mxu0
    %1237 = vmatprep.subr.mxu0 %v538
    %1238 = vmatpush1.msra.mxu0 %v537
    %1239 = vmatprep.subr.mxu0 %v554
    %1240 = vmatpush1.msra.mxu0 %v553
    %1241 = vmatprep.subr.mxu0 %v570
    %1242 = vmatpush1.msra.mxu0 %v569
    %1243 = vmatprep.subr.mxu0 %v586
    %1244 = vmatpush1.msra.mxu0 %v585
    %1245 = vmatprep.subr.mxu0 0.0
    %1246 = vmatpush1.msra.mxu0 0.0
    %1247 = vmatprep.subr.mxu0 0.0
    %1248 = vmatpush1.msra.mxu0 0.0
    %1249 = vmatprep.subr.mxu0 0.0
    %1250 = vmatpush1.msra.mxu0 0.0
    %1251 = vmatprep.subr.mxu0 0.0
    %1252 = vmatpush1.msra.mxu0 0.0
    %1253 = vmatprep.subr.mxu0 0.0
    %1254 = vmatpush1.msra.mxu0 0.0
    %1255 = vmatprep.subr.mxu0 0.0
    %1256 = vmatpush1.msra.mxu0 0.0
    %1257 = vmatprep.subr.mxu0 0.0
    %1258 = vmatpush1.msra.mxu0 0.0
    %1259 = vmatprep.subr.mxu0 0.0
    %1260 = vmatpush1.msra.mxu0 0.0
    %1261 = vmatprep.subr.mxu0 0.0
    %1262 = vmatpush1.msra.mxu0 0.0
    %1263 = vmatprep.subr.mxu0 0.0
    %1264 = vmatpush1.msra.mxu0 0.0
    %1265 = vmatprep.subr.mxu0 0.0
    %1266 = vmatpush1.msra.mxu0 0.0
    %1267 = vmatprep.subr.mxu0 0.0
    %1268 = vmatpush1.msra.mxu0 0.0
    %1269 = vmatprep.subr.mxu0 0.0
    %1270 = vmatpush1.msra.mxu0 0.0
    %1271 = vmatprep.subr.mxu0 0.0
    %1272 = vmatpush1.msra.mxu0 0.0
    %1273 = vmatprep.subr.mxu0 0.0
    %1274 = vmatpush1.msra.mxu0 0.0
    %1275 = vmatprep.subr.mxu0 0.0
    %1276 = vmatpush1.msra.mxu0 0.0
    %1277 = vmatprep.subr.mxu0 0.0
    %1278 = vmatpush1.msra.mxu0 0.0
    %1279 = vmatprep.subr.mxu0 0.0
    %1280 = vmatpush1.msra.mxu0 0.0
    %1281 = vmatprep.subr.mxu0 0.0
    %1282 = vmatpush1.msra.mxu0 0.0
    %1283 = vmatprep.subr.mxu0 0.0
    %1284 = vmatpush1.msra.mxu0 0.0
    %1285 = vmatprep.subr.mxu0 0.0
    %1286 = vmatpush1.msra.mxu0 0.0
    %1287 = vmatprep.subr.mxu0 0.0
    %1288 = vmatpush1.msra.mxu0 0.0
    %1289 = vmatprep.subr.mxu0 0.0
    %1290 = vmatpush1.msra.mxu0 0.0
    %1291 = vmatprep.subr.mxu0 0.0
    %1292 = vmatpush1.msra.mxu0 0.0
    %1293 = vmatprep.subr.mxu0 0.0
    %1294 = vmatpush1.msra.mxu0 0.0
    %1295 = vmatprep.subr.mxu0 0.0
    %1296 = vmatpush1.msra.mxu0 0.0
    %1297 = vmatprep.subr.mxu0 0.0
    %1298 = vmatpush1.msra.mxu0 0.0
    %1299 = vmatprep.subr.mxu0 0.0
    %1300 = vmatpush1.msra.mxu0 0.0
    %1301 = vmatprep.mubr.f32.mxu0 0.0
    %1302 = vmatmul.mubr.f32.gmra.mrb[0].mxu0 %v649
    %v1303 = vpop.f32.mrb[0].mxu0
    %v1304 = vadd.f32 %v610, %v1303
    %v1305 = vpop.f32.mrb[0].mxu0
    %v1306 = vadd.f32 %v610, %v1305
    %1307 = vmatprep.mubr.f32.mxu0 0.0
    %1308 = vmatmul.mubr.f32.gmra.mrb[0].mxu0 %v652
    %v1309 = vpop.f32.mrb[0].mxu0
    %v1310 = vadd.f32 %v615, %v1309
    %v1311 = vpop.f32.mrb[0].mxu0
    %v1312 = vadd.f32 %v615, %v1311
    %1313 = vmatprep.mubr.f32.mxu0 0.0
    %1314 = vmatmul.mubr.f32.gmra.mrb[0].mxu0 %v655
    %v1315 = vpop.f32.mrb[0].mxu0
    %v1316 = vadd.f32 %v620, %v1315
    %v1317 = vpop.f32.mrb[0].mxu0
    %v1318 = vadd.f32 %v620, %v1317
    %1319 = vmatprep.mubr.f32.mxu0 0.0
    %1320 = vmatmul.mubr.f32.gmra.mrb[0].mxu0 %v658
    %v1321 = vpop.f32.mrb[0].mxu0
    %v1322 = vadd.f32 %v625, %v1321
    %v1323 = vpop.f32.mrb[0].mxu0
    %v1324 = vadd.f32 %v625, %v1323
    %1325 = vmatprep.mubr.f32.mxu0 0.0
    %1326 = vmatmul.mubr.f32.gmra.mrb[0].mxu0 %v661
    %v1327 = vpop.f32.mrb[0].mxu0
    %v1328 = vadd.f32 %v630, %v1327
    %v1329 = vpop.f32.mrb[0].mxu0
    %v1330 = vadd.f32 %v630, %v1329
    %1331 = vmatprep.mubr.f32.mxu0 0.0
    %1332 = vmatmul.mubr.f32.gmra.mrb[0].mxu0 %v664
    %v1333 = vpop.f32.mrb[0].mxu0
    %v1334 = vadd.f32 %v635, %v1333
    %v1335 = vpop.f32.mrb[0].mxu0
    %v1336 = vadd.f32 %v635, %v1335
    %1337 = vmatprep.mubr.f32.mxu0 0.0
    %1338 = vmatmul.mubr.f32.gmra.mrb[0].mxu0 %v667
    %v1339 = vpop.f32.mrb[0].mxu0
    %v1340 = vadd.f32 %v640, %v1339
    %v1341 = vpop.f32.mrb[0].mxu0
    %v1342 = vadd.f32 %v640, %v1341
    %1343 = vmatprep.mubr.f32.mxu0 0.0
    %1344 = vmatmul.mubr.f32.gmra.mrb[0].mxu0 %v670
    %v1345 = vpop.f32.mrb[0].mxu0
    %v1346 = vadd.f32 %v645, %v1345
    %v1347 = vpop.f32.mrb[0].mxu0
    %v1348 = vadd.f32 %v645, %v1347
    %1349 = vdwg.mxu0
    %1350 = vmatprep.subr.mxu0 %v540
    %1351 = vmatpush1.msra.mxu0 %v539
    %1352 = vmatprep.subr.mxu0 %v556
    %1353 = vmatpush1.msra.mxu0 %v555
    %1354 = vmatprep.subr.mxu0 %v572
    %1355 = vmatpush1.msra.mxu0 %v571
    %1356 = vmatprep.subr.mxu0 %v588
    %1357 = vmatpush1.msra.mxu0 %v587
    %1358 = vmatprep.subr.mxu0 0.0
    %1359 = vmatpush1.msra.mxu0 0.0
    %1360 = vmatprep.subr.mxu0 0.0
    %1361 = vmatpush1.msra.mxu0 0.0
    %1362 = vmatprep.subr.mxu0 0.0
    %1363 = vmatpush1.msra.mxu0 0.0
    %1364 = vmatprep.subr.mxu0 0.0
    %1365 = vmatpush1.msra.mxu0 0.0
    %1366 = vmatprep.subr.mxu0 0.0
    %1367 = vmatpush1.msra.mxu0 0.0
    %1368 = vmatprep.subr.mxu0 0.0
    %1369 = vmatpush1.msra.mxu0 0.0
    %1370 = vmatprep.subr.mxu0 0.0
    %1371 = vmatpush1.msra.mxu0 0.0
    %1372 = vmatprep.subr.mxu0 0.0
    %1373 = vmatpush1.msra.mxu0 0.0
    %1374 = vmatprep.subr.mxu0 0.0
    %1375 = vmatpush1.msra.mxu0 0.0
    %1376 = vmatprep.subr.mxu0 0.0
    %1377 = vmatpush1.msra.mxu0 0.0
    %1378 = vmatprep.subr.mxu0 0.0
    %1379 = vmatpush1.msra.mxu0 0.0
    %1380 = vmatprep.subr.mxu0 0.0
    %1381 = vmatpush1.msra.mxu0 0.0
    %1382 = vmatprep.subr.mxu0 0.0
    %1383 = vmatpush1.msra.mxu0 0.0
    %1384 = vmatprep.subr.mxu0 0.0
    %1385 = vmatpush1.msra.mxu0 0.0
    %1386 = vmatprep.subr.mxu0 0.0
    %1387 = vmatpush1.msra.mxu0 0.0
    %1388 = vmatprep.subr.mxu0 0.0
    %1389 = vmatpush1.msra.mxu0 0.0
    %1390 = vmatprep.subr.mxu0 0.0
    %1391 = vmatpush1.msra.mxu0 0.0
    %1392 = vmatprep.subr.mxu0 0.0
    %1393 = vmatpush1.msra.mxu0 0.0
    %1394 = vmatprep.subr.mxu0 0.0
    %1395 = vmatpush1.msra.mxu0 0.0
    %1396 = vmatprep.subr.mxu0 0.0
    %1397 = vmatpush1.msra.mxu0 0.0
    %1398 = vmatprep.subr.mxu0 0.0
    %1399 = vmatpush1.msra.mxu0 0.0
    %1400 = vmatprep.subr.mxu0 0.0
    %1401 = vmatpush1.msra.mxu0 0.0
    %1402 = vmatprep.subr.mxu0 0.0
    %1403 = vmatpush1.msra.mxu0 0.0
    %1404 = vmatprep.subr.mxu0 0.0
    %1405 = vmatpush1.msra.mxu0 0.0
    %1406 = vmatprep.subr.mxu0 0.0
    %1407 = vmatpush1.msra.mxu0 0.0
    %1408 = vmatprep.subr.mxu0 0.0
    %1409 = vmatpush1.msra.mxu0 0.0
    %1410 = vmatprep.subr.mxu0 0.0
    %1411 = vmatpush1.msra.mxu0 0.0
    %1412 = vmatprep.subr.mxu0 0.0
    %1413 = vmatpush1.msra.mxu0 0.0
    %1414 = vmatprep.mubr.f32.mxu0 0.0
    %1415 = vmatmul.mubr.f32.gmra.mrb[0].mxu0 %v649
    %v1416 = vpop.f32.mrb[0].mxu0
    %v1417 = vadd.f32 %v610, %v1416
    %v1418 = vpop.f32.mrb[0].mxu0
    %v1419 = vadd.f32 %v610, %v1418
    %1420 = vmatprep.mubr.f32.mxu0 0.0
    %1421 = vmatmul.mubr.f32.gmra.mrb[0].mxu0 %v652
    %v1422 = vpop.f32.mrb[0].mxu0
    %v1423 = vadd.f32 %v615, %v1422
    %v1424 = vpop.f32.mrb[0].mxu0
    %v1425 = vadd.f32 %v615, %v1424
    %1426 = vmatprep.mubr.f32.mxu0 0.0
    %1427 = vmatmul.mubr.f32.gmra.mrb[0].mxu0 %v655
    %v1428 = vpop.f32.mrb[0].mxu0
    %v1429 = vadd.f32 %v620, %v1428
    %v1430 = vpop.f32.mrb[0].mxu0
    %v1431 = vadd.f32 %v620, %v1430
    %1432 = vmatprep.mubr.f32.mxu0 0.0
    %1433 = vmatmul.mubr.f32.gmra.mrb[0].mxu0 %v658
    %v1434 = vpop.f32.mrb[0].mxu0
    %v1435 = vadd.f32 %v625, %v1434
    %v1436 = vpop.f32.mrb[0].mxu0
    %v1437 = vadd.f32 %v625, %v1436
    %1438 = vmatprep.mubr.f32.mxu0 0.0
    %1439 = vmatmul.mubr.f32.gmra.mrb[0].mxu0 %v661
    %v1440 = vpop.f32.mrb[0].mxu0
    %v1441 = vadd.f32 %v630, %v1440
    %v1442 = vpop.f32.mrb[0].mxu0
    %v1443 = vadd.f32 %v630, %v1442
    %1444 = vmatprep.mubr.f32.mxu0 0.0
    %1445 = vmatmul.mubr.f32.gmra.mrb[0].mxu0 %v664
    %v1446 = vpop.f32.mrb[0].mxu0
    %v1447 = vadd.f32 %v635, %v1446
    %v1448 = vpop.f32.mrb[0].mxu0
    %v1449 = vadd.f32 %v635, %v1448
    %1450 = vmatprep.mubr.f32.mxu0 0.0
    %1451 = vmatmul.mubr.f32.gmra.mrb[0].mxu0 %v667
    %v1452 = vpop.f32.mrb[0].mxu0
    %v1453 = vadd.f32 %v640, %v1452
    %v1454 = vpop.f32.mrb[0].mxu0
    %v1455 = vadd.f32 %v640, %v1454
    %1456 = vmatprep.mubr.f32.mxu0 0.0
    %1457 = vmatmul.mubr.f32.gmra.mrb[0].mxu0 %v670
    %v1458 = vpop.f32.mrb[0].mxu0
    %v1459 = vadd.f32 %v645, %v1458
    %v1460 = vpop.f32.mrb[0].mxu0
    %v1461 = vadd.f32 %v645, %v1460
    %1462 = vdwg.mxu0
    %1463 = vmatprep.subr.mxu0 %v542
    %1464 = vmatpush1.msra.mxu0 %v541
    %1465 = vmatprep.subr.mxu0 %v558
    %1466 = vmatpush1.msra.mxu0 %v557
    %1467 = vmatprep.subr.mxu0 %v574
    %1468 = vmatpush1.msra.mxu0 %v573
    %1469 = vmatprep.subr.mxu0 %v590
    %1470 = vmatpush1.msra.mxu0 %v589
    %1471 = vmatprep.subr.mxu0 0.0
    %1472 = vmatpush1.msra.mxu0 0.0
    %1473 = vmatprep.subr.mxu0 0.0
    %1474 = vmatpush1.msra.mxu0 0.0
    %1475 = vmatprep.subr.mxu0 0.0
    %1476 = vmatpush1.msra.mxu0 0.0
    %1477 = vmatprep.subr.mxu0 0.0
    %1478 = vmatpush1.msra.mxu0 0.0
    %1479 = vmatprep.subr.mxu0 0.0
    %1480 = vmatpush1.msra.mxu0 0.0
    %1481 = vmatprep.subr.mxu0 0.0
    %1482 = vmatpush1.msra.mxu0 0.0
    %1483 = vmatprep.subr.mxu0 0.0
    %1484 = vmatpush1.msra.mxu0 0.0
    %1485 = vmatprep.subr.mxu0 0.0
    %1486 = vmatpush1.msra.mxu0 0.0
    %1487 = vmatprep.subr.mxu0 0.0
    %1488 = vmatpush1.msra.mxu0 0.0
    %1489 = vmatprep.subr.mxu0 0.0
    %1490 = vmatpush1.msra.mxu0 0.0
    %1491 = vmatprep.subr.mxu0 0.0
    %1492 = vmatpush1.msra.mxu0 0.0
    %1493 = vmatprep.subr.mxu0 0.0
    %1494 = vmatpush1.msra.mxu0 0.0
    %1495 = vmatprep.subr.mxu0 0.0
    %1496 = vmatpush1.msra.mxu0 0.0
    %1497 = vmatprep.subr.mxu0 0.0
    %1498 = vmatpush1.msra.mxu0 0.0
    %1499 = vmatprep.subr.mxu0 0.0
    %1500 = vmatpush1.msra.mxu0 0.0
    %1501 = vmatprep.subr.mxu0 0.0
    %1502 = vmatpush1.msra.mxu0 0.0
    %1503 = vmatprep.subr.mxu0 0.0
    %1504 = vmatpush1.msra.mxu0 0.0
    %1505 = vmatprep.subr.mxu0 0.0
    %1506 = vmatpush1.msra.mxu0 0.0
    %1507 = vmatprep.subr.mxu0 0.0
    %1508 = vmatpush1.msra.mxu0 0.0
    %1509 = vmatprep.subr.mxu0 0.0
    %1510 = vmatpush1.msra.mxu0 0.0
    %1511 = vmatprep.subr.mxu0 0.0
    %1512 = vmatpush1.msra.mxu0 0.0
    %1513 = vmatprep.subr.mxu0 0.0
    %1514 = vmatpush1.msra.mxu0 0.0
    %1515 = vmatprep.subr.mxu0 0.0
    %1516 = vmatpush1.msra.mxu0 0.0
    %1517 = vmatprep.subr.mxu0 0.0
    %1518 = vmatpush1.msra.mxu0 0.0
    %1519 = vmatprep.subr.mxu0 0.0
    %1520 = vmatpush1.msra.mxu0 0.0
    %1521 = vmatprep.subr.mxu0 0.0
    %1522 = vmatpush1.msra.mxu0 0.0
    %1523 = vmatprep.subr.mxu0 0.0
    %1524 = vmatpush1.msra.mxu0 0.0
    %1525 = vmatprep.subr.mxu0 0.0
    %1526 = vmatpush1.msra.mxu0 0.0
    %1527 = vmatprep.mubr.f32.mxu0 0.0
    %1528 = vmatmul.mubr.f32.gmra.mrb[0].mxu0 %v649
    %v1529 = vpop.f32.mrb[0].mxu0
    %v1530 = vadd.f32 %v610, %v1529
    %v1531 = vpop.f32.mrb[0].mxu0
    %v1532 = vadd.f32 %v610, %v1531
    %1533 = vmatprep.mubr.f32.mxu0 0.0
    %1534 = vmatmul.mubr.f32.gmra.mrb[0].mxu0 %v652
    %v1535 = vpop.f32.mrb[0].mxu0
    %v1536 = vadd.f32 %v615, %v1535
    %v1537 = vpop.f32.mrb[0].mxu0
    %v1538 = vadd.f32 %v615, %v1537
    %1539 = vmatprep.mubr.f32.mxu0 0.0
    %1540 = vmatmul.mubr.f32.gmra.mrb[0].mxu0 %v655
    %v1541 = vpop.f32.mrb[0].mxu0
    %v1542 = vadd.f32 %v620, %v1541
    %v1543 = vpop.f32.mrb[0].mxu0
    %v1544 = vadd.f32 %v620, %v1543
    %1545 = vmatprep.mubr.f32.mxu0 0.0
    %1546 = vmatmul.mubr.f32.gmra.mrb[0].mxu0 %v658
    %v1547 = vpop.f32.mrb[0].mxu0
    %v1548 = vadd.f32 %v625, %v1547
    %v1549 = vpop.f32.mrb[0].mxu0
    %v1550 = vadd.f32 %v625, %v1549
    %1551 = vmatprep.mubr.f32.mxu0 0.0
    %1552 = vmatmul.mubr.f32.gmra.mrb[0].mxu0 %v661
    %v1553 = vpop.f32.mrb[0].mxu0
    %v1554 = vadd.f32 %v630, %v1553
    %v1555 = vpop.f32.mrb[0].mxu0
    %v1556 = vadd.f32 %v630, %v1555
    %1557 = vmatprep.mubr.f32.mxu0 0.0
    %1558 = vmatmul.mubr.f32.gmra.mrb[0].mxu0 %v664
    %v1559 = vpop.f32.mrb[0].mxu0
    %v1560 = vadd.f32 %v635, %v1559
    %v1561 = vpop.f32.mrb[0].mxu0
    %v1562 = vadd.f32 %v635, %v1561
    %1563 = vmatprep.mubr.f32.mxu0 0.0
    %1564 = vmatmul.mubr.f32.gmra.mrb[0].mxu0 %v667
    %v1565 = vpop.f32.mrb[0].mxu0
    %v1566 = vadd.f32 %v640, %v1565
    %v1567 = vpop.f32.mrb[0].mxu0
    %v1568 = vadd.f32 %v640, %v1567
    %1569 = vmatprep.mubr.f32.mxu0 0.0
    %1570 = vmatmul.mubr.f32.gmra.mrb[0].mxu0 %v670
    %v1571 = vpop.f32.mrb[0].mxu0
    %v1572 = vadd.f32 %v645, %v1571
    %v1573 = vpop.f32.mrb[0].mxu0
    %v1574 = vadd.f32 %v645, %v1573
    %1575 = vdwg.mxu0
    %v1576 = vmax.f32 %v739, 0.0
    %v1577 = vmax.f32 %v741, 0.0
    %v1578 = vmax.f32 %v852, 0.0
    %v1579 = vmax.f32 %v854, 0.0
    %v1580 = vmax.f32 %v965, 0.0
    %v1581 = vmax.f32 %v967, 0.0
    %v1582 = vmax.f32 %v1078, 0.0
    %v1583 = vmax.f32 %v1080, 0.0
    %v1584 = vmax.f32 %v1191, 0.0
    %v1585 = vmax.f32 %v1193, 0.0
    %v1586 = vmax.f32 %v1304, 0.0
    %v1587 = vmax.f32 %v1306, 0.0
    %v1588 = vmax.f32 %v1417, 0.0
    %v1589 = vmax.f32 %v1419, 0.0
    %v1590 = vmax.f32 %v1530, 0.0
    %v1591 = vmax.f32 %v1532, 0.0
    %v1592 = vmax.f32 %v745, 0.0
    %v1593 = vmax.f32 %v747, 0.0
    %v1594 = vmax.f32 %v858, 0.0
    %v1595 = vmax.f32 %v860, 0.0
    %v1596 = vmax.f32 %v971, 0.0
    %v1597 = vmax.f32 %v973, 0.0
    %v1598 = vmax.f32 %v1084, 0.0
    %v1599 = vmax.f32 %v1086, 0.0
    %v1600 = vmax.f32 %v1197, 0.0
    %v1601 = vmax.f32 %v1199, 0.0
    %v1602 = vmax.f32 %v1310, 0.0
    %v1603 = vmax.f32 %v1312, 0.0
    %v1604 = vmax.f32 %v1423, 0.0
    %v1605 = vmax.f32 %v1425, 0.0
    %v1606 = vmax.f32 %v1536, 0.0
    %v1607 = vmax.f32 %v1538, 0.0
    %v1608 = vmax.f32 %v751, 0.0
    %v1609 = vmax.f32 %v753, 0.0
    %v1610 = vmax.f32 %v864, 0.0
    %v1611 = vmax.f32 %v866, 0.0
    %v1612 = vmax.f32 %v977, 0.0
    %v1613 = vmax.f32 %v979, 0.0
    %v1614 = vmax.f32 %v1090, 0.0
    %v1615 = vmax.f32 %v1092, 0.0
    %v1616 = vmax.f32 %v1203, 0.0
    %v1617 = vmax.f32 %v1205, 0.0
    %v1618 = vmax.f32 %v1316, 0.0
    %v1619 = vmax.f32 %v1318, 0.0
    %v1620 = vmax.f32 %v1429, 0.0
    %v1621 = vmax.f32 %v1431, 0.0
    %v1622 = vmax.f32 %v1542, 0.0
    %v1623 = vmax.f32 %v1544, 0.0
    %v1624 = vmax.f32 %v757, 0.0
    %v1625 = vmax.f32 %v759, 0.0
    %v1626 = vmax.f32 %v870, 0.0
    %v1627 = vmax.f32 %v872, 0.0
    %v1628 = vmax.f32 %v983, 0.0
    %v1629 = vmax.f32 %v985, 0.0
    %v1630 = vmax.f32 %v1096, 0.0
    %v1631 = vmax.f32 %v1098, 0.0
    %v1632 = vmax.f32 %v1209, 0.0
    %v1633 = vmax.f32 %v1211, 0.0
    %v1634 = vmax.f32 %v1322, 0.0
    %v1635 = vmax.f32 %v1324, 0.0
    %v1636 = vmax.f32 %v1435, 0.0
    %v1637 = vmax.f32 %v1437, 0.0
    %v1638 = vmax.f32 %v1548, 0.0
    %v1639 = vmax.f32 %v1550, 0.0
    %v1640 = vmax.f32 %v763, 0.0
    %v1641 = vmax.f32 %v765, 0.0
    %v1642 = vmax.f32 %v876, 0.0
    %v1643 = vmax.f32 %v878, 0.0
    %v1644 = vmax.f32 %v989, 0.0
    %v1645 = vmax.f32 %v991, 0.0
    %v1646 = vmax.f32 %v1102, 0.0
    %v1647 = vmax.f32 %v1104, 0.0
    %v1648 = vmax.f32 %v1215, 0.0
    %v1649 = vmax.f32 %v1217, 0.0
    %v1650 = vmax.f32 %v1328, 0.0
    %v1651 = vmax.f32 %v1330, 0.0
    %v1652 = vmax.f32 %v1441, 0.0
    %v1653 = vmax.f32 %v1443, 0.0
    %v1654 = vmax.f32 %v1554, 0.0
    %v1655 = vmax.f32 %v1556, 0.0
    %v1656 = vmax.f32 %v769, 0.0
    %v1657 = vmax.f32 %v771, 0.0
    %v1658 = vmax.f32 %v882, 0.0
    %v1659 = vmax.f32 %v884, 0.0
    %v1660 = vmax.f32 %v995, 0.0
    %v1661 = vmax.f32 %v997, 0.0
    %v1662 = vmax.f32 %v1108, 0.0
    %v1663 = vmax.f32 %v1110, 0.0
    %v1664 = vmax.f32 %v1221, 0.0
    %v1665 = vmax.f32 %v1223, 0.0
    %v1666 = vmax.f32 %v1334, 0.0
    %v1667 = vmax.f32 %v1336, 0.0
    %v1668 = vmax.f32 %v1447, 0.0
    %v1669 = vmax.f32 %v1449, 0.0
    %v1670 = vmax.f32 %v1560, 0.0
    %v1671 = vmax.f32 %v1562, 0.0
    %v1672 = vmax.f32 %v775, 0.0
    %v1673 = vmax.f32 %v777, 0.0
    %v1674 = vmax.f32 %v888, 0.0
    %v1675 = vmax.f32 %v890, 0.0
    %v1676 = vmax.f32 %v1001, 0.0
    %v1677 = vmax.f32 %v1003, 0.0
    %v1678 = vmax.f32 %v1114, 0.0
    %v1679 = vmax.f32 %v1116, 0.0
    %v1680 = vmax.f32 %v1227, 0.0
    %v1681 = vmax.f32 %v1229, 0.0
    %v1682 = vmax.f32 %v1340, 0.0
    %v1683 = vmax.f32 %v1342, 0.0
    %v1684 = vmax.f32 %v1453, 0.0
    %v1685 = vmax.f32 %v1455, 0.0
    %v1686 = vmax.f32 %v1566, 0.0
    %v1687 = vmax.f32 %v1568, 0.0
    %v1688 = vmax.f32 %v781, 0.0
    %v1689 = vmax.f32 %v783, 0.0
    %v1690 = vmax.f32 %v894, 0.0
    %v1691 = vmax.f32 %v896, 0.0
    %v1692 = vmax.f32 %v1007, 0.0
    %v1693 = vmax.f32 %v1009, 0.0
    %v1694 = vmax.f32 %v1120, 0.0
    %v1695 = vmax.f32 %v1122, 0.0
    %v1696 = vmax.f32 %v1233, 0.0
    %v1697 = vmax.f32 %v1235, 0.0
    %v1698 = vmax.f32 %v1346, 0.0
    %v1699 = vmax.f32 %v1348, 0.0
    %v1700 = vmax.f32 %v1459, 0.0
    %v1701 = vmax.f32 %v1461, 0.0
    %v1702 = vmax.f32 %v1572, 0.0
    %v1703 = vmax.f32 %v1574, 0.0
    %v1704 = vld [vmem:[%s5] sm:$0xff]
    %v1705 = vld [vmem:[%s5 + $0x8] sm:$0xff]
    %v1706 = vld [vmem:[%s5 + $0x10] sm:$0xff]
    %v1707 = vld [vmem:[%s5 + $0x18] sm:$0xff]
    %v1708 = vld [vmem:[%s5 + $0x20] sm:$0xff]
    %v1709 = vld [vmem:[%s5 + $0x28] sm:$0xff]
    %v1710 = vld [vmem:[%s5 + $0x30] sm:$0xff]
    %v1711 = vld [vmem:[%s5 + $0x38] sm:$0xff]
    %1713 = vset.pattern.permute.xlu0 0
    %1714 = vperm.xlu0 %1713, %v1704
    %v1715 = vpop.permute.xlu0 %1714
    %1718 = vset.pattern.permute.xlu0 0
    %1719 = vperm.xlu0 %1718, %v1705
    %v1720 = vpop.permute.xlu0 %1719
    %1723 = vset.pattern.permute.xlu0 0
    %1724 = vperm.xlu0 %1723, %v1706
    %v1725 = vpop.permute.xlu0 %1724
    %1728 = vset.pattern.permute.xlu0 0
    %1729 = vperm.xlu0 %1728, %v1707
    %v1730 = vpop.permute.xlu0 %1729
    %1733 = vset.pattern.permute.xlu0 0
    %1734 = vperm.xlu0 %1733, %v1708
    %v1735 = vpop.permute.xlu0 %1734
    %1738 = vset.pattern.permute.xlu0 0
    %1739 = vperm.xlu0 %1738, %v1709
    %v1740 = vpop.permute.xlu0 %1739
    %1743 = vset.pattern.permute.xlu0 0
    %1744 = vperm.xlu0 %1743, %v1710
    %v1745 = vpop.permute.xlu0 %1744
    %1748 = vset.pattern.permute.xlu0 0
    %1749 = vperm.xlu0 %1748, %v1711
    %v1750 = vpop.permute.xlu0 %1749
    %v1752 = vmul.f32 %v1715, %v1576
    %v1753 = vmul.f32 %v1715, %v1577
    %v1754 = vmul.f32 %v1715, %v1578
    %v1755 = vmul.f32 %v1715, %v1579
    %v1756 = vmul.f32 %v1715, %v1580
    %v1757 = vmul.f32 %v1715, %v1581
    %v1758 = vmul.f32 %v1715, %v1582
    %v1759 = vmul.f32 %v1715, %v1583
    %v1760 = vmul.f32 %v1715, %v1584
    %v1761 = vmul.f32 %v1715, %v1585
    %v1762 = vmul.f32 %v1715, %v1586
    %v1763 = vmul.f32 %v1715, %v1587
    %v1764 = vmul.f32 %v1715, %v1588
    %v1765 = vmul.f32 %v1715, %v1589
    %v1766 = vmul.f32 %v1715, %v1590
    %v1767 = vmul.f32 %v1715, %v1591
    %v1768 = vmul.f32 %v1720, %v1592
    %v1769 = vmul.f32 %v1720, %v1593
    %v1770 = vmul.f32 %v1720, %v1594
    %v1771 = vmul.f32 %v1720, %v1595
    %v1772 = vmul.f32 %v1720, %v1596
    %v1773 = vmul.f32 %v1720, %v1597
    %v1774 = vmul.f32 %v1720, %v1598
    %v1775 = vmul.f32 %v1720, %v1599
    %v1776 = vmul.f32 %v1720, %v1600
    %v1777 = vmul.f32 %v1720, %v1601
    %v1778 = vmul.f32 %v1720, %v1602
    %v1779 = vmul.f32 %v1720, %v1603
    %v1780 = vmul.f32 %v1720, %v1604
    %v1781 = vmul.f32 %v1720, %v1605
    %v1782 = vmul.f32 %v1720, %v1606
    %v1783 = vmul.f32 %v1720, %v1607
    %v1784 = vmul.f32 %v1725, %v1608
    %v1785 = vmul.f32 %v1725, %v1609
    %v1786 = vmul.f32 %v1725, %v1610
    %v1787 = vmul.f32 %v1725, %v1611
    %v1788 = vmul.f32 %v1725, %v1612
    %v1789 = vmul.f32 %v1725, %v1613
    %v1790 = vmul.f32 %v1725, %v1614
    %v1791 = vmul.f32 %v1725, %v1615
    %v1792 = vmul.f32 %v1725, %v1616
    %v1793 = vmul.f32 %v1725, %v1617
    %v1794 = vmul.f32 %v1725, %v1618
    %v1795 = vmul.f32 %v1725, %v1619
    %v1796 = vmul.f32 %v1725, %v1620
    %v1797 = vmul.f32 %v1725, %v1621
    %v1798 = vmul.f32 %v1725, %v1622
    %v1799 = vmul.f32 %v1725, %v1623
    %v1800 = vmul.f32 %v1730, %v1624
    %v1801 = vmul.f32 %v1730, %v1625
    %v1802 = vmul.f32 %v1730, %v1626
    %v1803 = vmul.f32 %v1730, %v1627
    %v1804 = vmul.f32 %v1730, %v1628
    %v1805 = vmul.f32 %v1730, %v1629
    %v1806 = vmul.f32 %v1730, %v1630
    %v1807 = vmul.f32 %v1730, %v1631
    %v1808 = vmul.f32 %v1730, %v1632
    %v1809 = vmul.f32 %v1730, %v1633
    %v1810 = vmul.f32 %v1730, %v1634
    %v1811 = vmul.f32 %v1730, %v1635
    %v1812 = vmul.f32 %v1730, %v1636
    %v1813 = vmul.f32 %v1730, %v1637
    %v1814 = vmul.f32 %v1730, %v1638
    %v1815 = vmul.f32 %v1730, %v1639
    %v1816 = vmul.f32 %v1735, %v1640
    %v1817 = vmul.f32 %v1735, %v1641
    %v1818 = vmul.f32 %v1735, %v1642
    %v1819 = vmul.f32 %v1735, %v1643
    %v1820 = vmul.f32 %v1735, %v1644
    %v1821 = vmul.f32 %v1735, %v1645
    %v1822 = vmul.f32 %v1735, %v1646
    %v1823 = vmul.f32 %v1735, %v1647
    %v1824 = vmul.f32 %v1735, %v1648
    %v1825 = vmul.f32 %v1735, %v1649
    %v1826 = vmul.f32 %v1735, %v1650
    %v1827 = vmul.f32 %v1735, %v1651
    %v1828 = vmul.f32 %v1735, %v1652
    %v1829 = vmul.f32 %v1735, %v1653
    %v1830 = vmul.f32 %v1735, %v1654
    %v1831 = vmul.f32 %v1735, %v1655
    %v1832 = vmul.f32 %v1740, %v1656
    %v1833 = vmul.f32 %v1740, %v1657
    %v1834 = vmul.f32 %v1740, %v1658
    %v1835 = vmul.f32 %v1740, %v1659
    %v1836 = vmul.f32 %v1740, %v1660
    %v1837 = vmul.f32 %v1740, %v1661
    %v1838 = vmul.f32 %v1740, %v1662
    %v1839 = vmul.f32 %v1740, %v1663
    %v1840 = vmul.f32 %v1740, %v1664
    %v1841 = vmul.f32 %v1740, %v1665
    %v1842 = vmul.f32 %v1740, %v1666
    %v1843 = vmul.f32 %v1740, %v1667
    %v1844 = vmul.f32 %v1740, %v1668
    %v1845 = vmul.f32 %v1740, %v1669
    %v1846 = vmul.f32 %v1740, %v1670
    %v1847 = vmul.f32 %v1740, %v1671
    %v1848 = vmul.f32 %v1745, %v1672
    %v1849 = vmul.f32 %v1745, %v1673
    %v1850 = vmul.f32 %v1745, %v1674
    %v1851 = vmul.f32 %v1745, %v1675
    %v1852 = vmul.f32 %v1745, %v1676
    %v1853 = vmul.f32 %v1745, %v1677
    %v1854 = vmul.f32 %v1745, %v1678
    %v1855 = vmul.f32 %v1745, %v1679
    %v1856 = vmul.f32 %v1745, %v1680
    %v1857 = vmul.f32 %v1745, %v1681
    %v1858 = vmul.f32 %v1745, %v1682
    %v1859 = vmul.f32 %v1745, %v1683
    %v1860 = vmul.f32 %v1745, %v1684
    %v1861 = vmul.f32 %v1745, %v1685
    %v1862 = vmul.f32 %v1745, %v1686
    %v1863 = vmul.f32 %v1745, %v1687
    %v1864 = vmul.f32 %v1750, %v1688
    %v1865 = vmul.f32 %v1750, %v1689
    %v1866 = vmul.f32 %v1750, %v1690
    %v1867 = vmul.f32 %v1750, %v1691
    %v1868 = vmul.f32 %v1750, %v1692
    %v1869 = vmul.f32 %v1750, %v1693
    %v1870 = vmul.f32 %v1750, %v1694
    %v1871 = vmul.f32 %v1750, %v1695
    %v1872 = vmul.f32 %v1750, %v1696
    %v1873 = vmul.f32 %v1750, %v1697
    %v1874 = vmul.f32 %v1750, %v1698
    %v1875 = vmul.f32 %v1750, %v1699
    %v1876 = vmul.f32 %v1750, %v1700
    %v1877 = vmul.f32 %v1750, %v1701
    %v1878 = vmul.f32 %v1750, %v1702
    %v1879 = vmul.f32 %v1750, %v1703
    %v1880 = vadd.f32 %v1752, %v1768
    %v1881 = vadd.f32 %v1880, %v1784
    %v1882 = vadd.f32 %v1881, %v1800
    %v1883 = vadd.f32 %v1882, %v1816
    %v1884 = vadd.f32 %v1883, %v1832
    %v1885 = vadd.f32 %v1884, %v1848
    %v1886 = vadd.f32 %v1885, %v1864
    %v1887 = vrot.slane %v1886, 4
    %v1888 = vadd.f32 %v1886, %v1887
    %v1889 = vrot.slane %v1888, 2
    %v1890 = vadd.f32 %v1888, %v1889
    %v1891 = vrot.slane %v1890, 1
    %v1892 = vadd.f32 %v1890, %v1891
    %v1893 = vadd.f32 %v1753, %v1769
    %v1894 = vadd.f32 %v1893, %v1785
    %v1895 = vadd.f32 %v1894, %v1801
    %v1896 = vadd.f32 %v1895, %v1817
    %v1897 = vadd.f32 %v1896, %v1833
    %v1898 = vadd.f32 %v1897, %v1849
    %v1899 = vadd.f32 %v1898, %v1865
    %v1900 = vrot.slane %v1899, 4
    %v1901 = vadd.f32 %v1899, %v1900
    %v1902 = vrot.slane %v1901, 2
    %v1903 = vadd.f32 %v1901, %v1902
    %v1904 = vrot.slane %v1903, 1
    %v1905 = vadd.f32 %v1903, %v1904
    %v1906 = vadd.f32 %v1754, %v1770
    %v1907 = vadd.f32 %v1906, %v1786
    %v1908 = vadd.f32 %v1907, %v1802
    %v1909 = vadd.f32 %v1908, %v1818
    %v1910 = vadd.f32 %v1909, %v1834
    %v1911 = vadd.f32 %v1910, %v1850
    %v1912 = vadd.f32 %v1911, %v1866
    %v1913 = vrot.slane %v1912, 4
    %v1914 = vadd.f32 %v1912, %v1913
    %v1915 = vrot.slane %v1914, 2
    %v1916 = vadd.f32 %v1914, %v1915
    %v1917 = vrot.slane %v1916, 1
    %v1918 = vadd.f32 %v1916, %v1917
    %v1919 = vadd.f32 %v1755, %v1771
    %v1920 = vadd.f32 %v1919, %v1787
    %v1921 = vadd.f32 %v1920, %v1803
    %v1922 = vadd.f32 %v1921, %v1819
    %v1923 = vadd.f32 %v1922, %v1835
    %v1924 = vadd.f32 %v1923, %v1851
    %v1925 = vadd.f32 %v1924, %v1867
    %v1926 = vrot.slane %v1925, 4
    %v1927 = vadd.f32 %v1925, %v1926
    %v1928 = vrot.slane %v1927, 2
    %v1929 = vadd.f32 %v1927, %v1928
    %v1930 = vrot.slane %v1929, 1
    %v1931 = vadd.f32 %v1929, %v1930
    %v1932 = vadd.f32 %v1756, %v1772
    %v1933 = vadd.f32 %v1932, %v1788
    %v1934 = vadd.f32 %v1933, %v1804
    %v1935 = vadd.f32 %v1934, %v1820
    %v1936 = vadd.f32 %v1935, %v1836
    %v1937 = vadd.f32 %v1936, %v1852
    %v1938 = vadd.f32 %v1937, %v1868
    %v1939 = vrot.slane %v1938, 4
    %v1940 = vadd.f32 %v1938, %v1939
    %v1941 = vrot.slane %v1940, 2
    %v1942 = vadd.f32 %v1940, %v1941
    %v1943 = vrot.slane %v1942, 1
    %v1944 = vadd.f32 %v1942, %v1943
    %v1945 = vadd.f32 %v1757, %v1773
    %v1946 = vadd.f32 %v1945, %v1789
    %v1947 = vadd.f32 %v1946, %v1805
    %v1948 = vadd.f32 %v1947, %v1821
    %v1949 = vadd.f32 %v1948, %v1837
    %v1950 = vadd.f32 %v1949, %v1853
    %v1951 = vadd.f32 %v1950, %v1869
    %v1952 = vrot.slane %v1951, 4
    %v1953 = vadd.f32 %v1951, %v1952
    %v1954 = vrot.slane %v1953, 2
    %v1955 = vadd.f32 %v1953, %v1954
    %v1956 = vrot.slane %v1955, 1
    %v1957 = vadd.f32 %v1955, %v1956
    %v1958 = vadd.f32 %v1758, %v1774
    %v1959 = vadd.f32 %v1958, %v1790
    %v1960 = vadd.f32 %v1959, %v1806
    %v1961 = vadd.f32 %v1960, %v1822
    %v1962 = vadd.f32 %v1961, %v1838
    %v1963 = vadd.f32 %v1962, %v1854
    %v1964 = vadd.f32 %v1963, %v1870
    %v1965 = vrot.slane %v1964, 4
    %v1966 = vadd.f32 %v1964, %v1965
    %v1967 = vrot.slane %v1966, 2
    %v1968 = vadd.f32 %v1966, %v1967
    %v1969 = vrot.slane %v1968, 1
    %v1970 = vadd.f32 %v1968, %v1969
    %v1971 = vadd.f32 %v1759, %v1775
    %v1972 = vadd.f32 %v1971, %v1791
    %v1973 = vadd.f32 %v1972, %v1807
    %v1974 = vadd.f32 %v1973, %v1823
    %v1975 = vadd.f32 %v1974, %v1839
    %v1976 = vadd.f32 %v1975, %v1855
    %v1977 = vadd.f32 %v1976, %v1871
    %v1978 = vrot.slane %v1977, 4
    %v1979 = vadd.f32 %v1977, %v1978
    %v1980 = vrot.slane %v1979, 2
    %v1981 = vadd.f32 %v1979, %v1980
    %v1982 = vrot.slane %v1981, 1
    %v1983 = vadd.f32 %v1981, %v1982
    %v1984 = vadd.f32 %v1760, %v1776
    %v1985 = vadd.f32 %v1984, %v1792
    %v1986 = vadd.f32 %v1985, %v1808
    %v1987 = vadd.f32 %v1986, %v1824
    %v1988 = vadd.f32 %v1987, %v1840
    %v1989 = vadd.f32 %v1988, %v1856
    %v1990 = vadd.f32 %v1989, %v1872
    %v1991 = vrot.slane %v1990, 4
    %v1992 = vadd.f32 %v1990, %v1991
    %v1993 = vrot.slane %v1992, 2
    %v1994 = vadd.f32 %v1992, %v1993
    %v1995 = vrot.slane %v1994, 1
    %v1996 = vadd.f32 %v1994, %v1995
    %v1997 = vadd.f32 %v1761, %v1777
    %v1998 = vadd.f32 %v1997, %v1793
    %v1999 = vadd.f32 %v1998, %v1809
    %v2000 = vadd.f32 %v1999, %v1825
    %v2001 = vadd.f32 %v2000, %v1841
    %v2002 = vadd.f32 %v2001, %v1857
    %v2003 = vadd.f32 %v2002, %v1873
    %v2004 = vrot.slane %v2003, 4
    %v2005 = vadd.f32 %v2003, %v2004
    %v2006 = vrot.slane %v2005, 2
    %v2007 = vadd.f32 %v2005, %v2006
    %v2008 = vrot.slane %v2007, 1
    %v2009 = vadd.f32 %v2007, %v2008
    %v2010 = vadd.f32 %v1762, %v1778
    %v2011 = vadd.f32 %v2010, %v1794
    %v2012 = vadd.f32 %v2011, %v1810
    %v2013 = vadd.f32 %v2012, %v1826
    %v2014 = vadd.f32 %v2013, %v1842
    %v2015 = vadd.f32 %v2014, %v1858
    %v2016 = vadd.f32 %v2015, %v1874
    %v2017 = vrot.slane %v2016, 4
    %v2018 = vadd.f32 %v2016, %v2017
    %v2019 = vrot.slane %v2018, 2
    %v2020 = vadd.f32 %v2018, %v2019
    %v2021 = vrot.slane %v2020, 1
    %v2022 = vadd.f32 %v2020, %v2021
    %v2023 = vadd.f32 %v1763, %v1779
    %v2024 = vadd.f32 %v2023, %v1795
    %v2025 = vadd.f32 %v2024, %v1811
    %v2026 = vadd.f32 %v2025, %v1827
    %v2027 = vadd.f32 %v2026, %v1843
    %v2028 = vadd.f32 %v2027, %v1859
    %v2029 = vadd.f32 %v2028, %v1875
    %v2030 = vrot.slane %v2029, 4
    %v2031 = vadd.f32 %v2029, %v2030
    %v2032 = vrot.slane %v2031, 2
    %v2033 = vadd.f32 %v2031, %v2032
    %v2034 = vrot.slane %v2033, 1
    %v2035 = vadd.f32 %v2033, %v2034
    %v2036 = vadd.f32 %v1764, %v1780
    %v2037 = vadd.f32 %v2036, %v1796
    %v2038 = vadd.f32 %v2037, %v1812
    %v2039 = vadd.f32 %v2038, %v1828
    %v2040 = vadd.f32 %v2039, %v1844
    %v2041 = vadd.f32 %v2040, %v1860
    %v2042 = vadd.f32 %v2041, %v1876
    %v2043 = vrot.slane %v2042, 4
    %v2044 = vadd.f32 %v2042, %v2043
    %v2045 = vrot.slane %v2044, 2
    %v2046 = vadd.f32 %v2044, %v2045
    %v2047 = vrot.slane %v2046, 1
    %v2048 = vadd.f32 %v2046, %v2047
    %v2049 = vadd.f32 %v1765, %v1781
    %v2050 = vadd.f32 %v2049, %v1797
    %v2051 = vadd.f32 %v2050, %v1813
    %v2052 = vadd.f32 %v2051, %v1829
    %v2053 = vadd.f32 %v2052, %v1845
    %v2054 = vadd.f32 %v2053, %v1861
    %v2055 = vadd.f32 %v2054, %v1877
    %v2056 = vrot.slane %v2055, 4
    %v2057 = vadd.f32 %v2055, %v2056
    %v2058 = vrot.slane %v2057, 2
    %v2059 = vadd.f32 %v2057, %v2058
    %v2060 = vrot.slane %v2059, 1
    %v2061 = vadd.f32 %v2059, %v2060
    %v2062 = vadd.f32 %v1766, %v1782
    %v2063 = vadd.f32 %v2062, %v1798
    %v2064 = vadd.f32 %v2063, %v1814
    %v2065 = vadd.f32 %v2064, %v1830
    %v2066 = vadd.f32 %v2065, %v1846
    %v2067 = vadd.f32 %v2066, %v1862
    %v2068 = vadd.f32 %v2067, %v1878
    %v2069 = vrot.slane %v2068, 4
    %v2070 = vadd.f32 %v2068, %v2069
    %v2071 = vrot.slane %v2070, 2
    %v2072 = vadd.f32 %v2070, %v2071
    %v2073 = vrot.slane %v2072, 1
    %v2074 = vadd.f32 %v2072, %v2073
    %v2075 = vadd.f32 %v1767, %v1783
    %v2076 = vadd.f32 %v2075, %v1799
    %v2077 = vadd.f32 %v2076, %v1815
    %v2078 = vadd.f32 %v2077, %v1831
    %v2079 = vadd.f32 %v2078, %v1847
    %v2080 = vadd.f32 %v2079, %v1863
    %v2081 = vadd.f32 %v2080, %v1879
    %v2082 = vrot.slane %v2081, 4
    %v2083 = vadd.f32 %v2081, %v2082
    %v2084 = vrot.slane %v2083, 2
    %v2085 = vadd.f32 %v2083, %v2084
    %v2086 = vrot.slane %v2085, 1
    %v2087 = vadd.f32 %v2085, %v2086
    %s2088 = sld [smem:[#allocation2]]
    %v2089 = vstv %s2088
    %v2090 = vadd.f32 %v1892, %v2089
    %v2091 = vadd.f32 %v1905, %v2089
    %v2092 = vadd.f32 %v1918, %v2089
    %v2093 = vadd.f32 %v1931, %v2089
    %v2094 = vadd.f32 %v1944, %v2089
    %v2095 = vadd.f32 %v1957, %v2089
    %v2096 = vadd.f32 %v1970, %v2089
    %v2097 = vadd.f32 %v1983, %v2089
    %v2098 = vadd.f32 %v1996, %v2089
    %v2099 = vadd.f32 %v2009, %v2089
    %v2100 = vadd.f32 %v2022, %v2089
    %v2101 = vadd.f32 %v2035, %v2089
    %v2102 = vadd.f32 %v2048, %v2089
    %v2103 = vadd.f32 %v2061, %v2089
    %v2104 = vadd.f32 %v2074, %v2089
    %v2105 = vadd.f32 %v2087, %v2089
    %v2122 = vcombine.low %v2090, %v2091
    %v2123 = vcombine.low %v2092, %v2093
    %v2124 = vcombine.low %v2094, %v2095
    %v2125 = vcombine.low %v2096, %v2097
    %v2127 = vunpack.c.l.s4 1966171168
    %v2128 = vunpack.c.0.s8 %v2127
    %v2129 = vlaneseq
    %v2130 = vshrl.u32 %v2129, 7
    %v2131 = vsub.s32 %v2128, %v2130
    %v2132 = vrot.slane %v2122, %v2131
    %v2134 = vunpack.c.l.s4 1966171168
    %v2135 = vunpack.c.0.s8 %v2134
    %v2136 = vlaneseq
    %v2137 = vshrl.u32 %v2136, 7
    %v2138 = vsub.s32 %v2135, %v2137
    %v2139 = vrot.slane %v2123, %v2138
    %v2141 = vunpack.c.l.s4 1966171168
    %v2142 = vunpack.c.0.s8 %v2141
    %v2143 = vlaneseq
    %v2144 = vshrl.u32 %v2143, 7
    %v2145 = vsub.s32 %v2142, %v2144
    %v2146 = vrot.slane %v2124, %v2145
    %v2148 = vunpack.c.l.s4 1966171168
    %v2149 = vunpack.c.0.s8 %v2148
    %v2150 = vlaneseq
    %v2151 = vshrl.u32 %v2150, 7
    %v2152 = vsub.s32 %v2149, %v2151
    %v2153 = vrot.slane %v2125, %v2152
    %v2154 = vcombine.low %v2132, %v2139
    %v2155 = vcombine.low %v2146, %v2153
    %v2157 = vunpack.c.l.s4 1966171168
    %v2158 = vunpack.c.0.s8 %v2157
    %v2159 = vlaneseq
    %v2160 = vshrl.u32 %v2159, 7
    %v2161 = vsub.s32 %v2158, %v2160
    %v2162 = vrot.slane %v2154, %v2161
    %v2164 = vunpack.c.l.s4 1966171168
    %v2165 = vunpack.c.0.s8 %v2164
    %v2166 = vlaneseq
    %v2167 = vshrl.u32 %v2166, 7
    %v2168 = vsub.s32 %v2165, %v2167
    %v2169 = vrot.slane %v2155, %v2168
    %v2170 = vcombine.low %v2162, %v2169
    %v2171 = vcombine.low %v2098, %v2099
    %v2172 = vcombine.low %v2100, %v2101
    %v2173 = vcombine.low %v2102, %v2103
    %v2174 = vcombine.low %v2104, %v2105
    %v2176 = vunpack.c.l.s4 1966171168
    %v2177 = vunpack.c.0.s8 %v2176
    %v2178 = vlaneseq
    %v2179 = vshrl.u32 %v2178, 7
    %v2180 = vsub.s32 %v2177, %v2179
    %v2181 = vrot.slane %v2171, %v2180
    %v2183 = vunpack.c.l.s4 1966171168
    %v2184 = vunpack.c.0.s8 %v2183
    %v2185 = vlaneseq
    %v2186 = vshrl.u32 %v2185, 7
    %v2187 = vsub.s32 %v2184, %v2186
    %v2188 = vrot.slane %v2172, %v2187
    %v2190 = vunpack.c.l.s4 1966171168
    %v2191 = vunpack.c.0.s8 %v2190
    %v2192 = vlaneseq
    %v2193 = vshrl.u32 %v2192, 7
    %v2194 = vsub.s32 %v2191, %v2193
    %v2195 = vrot.slane %v2173, %v2194
    %v2197 = vunpack.c.l.s4 1966171168
    %v2198 = vunpack.c.0.s8 %v2197
    %v2199 = vlaneseq
    %v2200 = vshrl.u32 %v2199, 7
    %v2201 = vsub.s32 %v2198, %v2200
    %v2202 = vrot.slane %v2174, %v2201
    %v2203 = vcombine.low %v2181, %v2188
    %v2204 = vcombine.low %v2195, %v2202
    %v2206 = vunpack.c.l.s4 1966171168
    %v2207 = vunpack.c.0.s8 %v2206
    %v2208 = vlaneseq
    %v2209 = vshrl.u32 %v2208, 7
    %v2210 = vsub.s32 %v2207, %v2209
    %v2211 = vrot.slane %v2203, %v2210
    %v2213 = vunpack.c.l.s4 1966171168
    %v2214 = vunpack.c.0.s8 %v2213
    %v2215 = vlaneseq
    %v2216 = vshrl.u32 %v2215, 7
    %v2217 = vsub.s32 %v2214, %v2216
    %v2218 = vrot.slane %v2204, %v2217
    %v2219 = vcombine.low %v2211, %v2218
    %2222 = vst [vmem:[#allocation3] sm:$0xff] %v2170
    %2223 = vst [vmem:[#allocation3 + $0x8] sm:$0xff] %v2219
    // Predicated region
    $region30: #{tpu_custom_call.1} parent=1 // pred_check
      _
    $region31: #{tpu_custom_call.1} parent=1 // pred_check_branch
      %2225 = sbr.rel (0) target = $region33
    $region32: #{tpu_custom_call.1} parent=1 // pred_region
      %s2227 = ssub.s32 256, 256
      %2228 = vsyncadd [#allocation4], %s2227
      %s2230 = sshll.u32 [#allocation3], 4
      %s2231 = int_to_ptr.vmem [resolvable:$true] %s2230
      %2233 = dma.vmem_to_hbm [thread:$0]  %s2231, 256, %s7, [#allocation4]
    $region33: #{tpu_custom_call.1} parent=1 // pred_fallthru
      _
    // Predicated region
    $region34: #{tpu_custom_call.1} parent=1 // pred_check
      _
    $region35: #{tpu_custom_call.1} parent=1 // pred_check_branch
      %2235 = sbr.rel (0) target = $region37
    $region36: #{tpu_custom_call.1} parent=1 // pred_region
      %2236 = dma.done [#allocation4], 256
    $region37: #{tpu_custom_call.1} parent=1 // pred_fallthru
      _
    %2237 = vsyncpa [#allocation4], 1

</llo_original>
